<compile_context>
chip_gen: v6e
topology: v6e:2x2x1
jax: 0.10.0
libtpu: 0.0.40
codegen_flags: <defaults>
</compile_context>

<pallas_src>
import functools
import math

import jax
import jax.numpy as jnp
from jax.experimental import pallas as pl
from jax.experimental.pallas import tpu as pltpu


# --------------------------------------------------------------------------
# Pallas kernel: one grid step = one (batch block, layer) pair.
# --------------------------------------------------------------------------
def _layernorm(v, g, b, eps=1e-5):
    mu = jnp.mean(v, axis=-1, keepdims=True)
    var = jnp.mean((v - mu) ** 2, axis=-1, keepdims=True)
    return (v - mu) * jax.lax.rsqrt(var + eps) * g + b


def fused_encoder_kernel(x_ref, wqkv_ref, wo_ref, w1_ref, w2_ref, p_ref,
                         fng_ref, fnb_ref, o_ref, acc_ref,
                         *, nhead, apply_final_norm):
    l = pl.program_id(1)
    nlayers = pl.num_programs(1)

    Bt, S, E = x_ref.shape
    M = Bt * S
    F = w1_ref.shape[-1]
    dh = E // nhead

    # Load the activation into the VMEM-resident f32 accumulator at layer 0.
    @pl.when(l == 0)
    def _():
        acc_ref[...] = x_ref[...].reshape(M, E).astype(jnp.float32)

    x = acc_ref[...]                                   # (M, E) f32
    xb = x.astype(jnp.bfloat16)

    # ---- packed tiny per-layer params: one DMA per layer ------------------
    P = p_ref[0]                                       # (8, W) f32
    bqkv = P[0:1, :3 * E]                              # (1, 3E) (q-part pre-scaled)
    b1 = P[1:2, :F]
    bo = P[2:3, :E]
    ln1g = P[3:4, :E]
    ln1b = P[4:5, :E]
    ln2g = P[5:6, :E]
    ln2b = P[6:7, :E]
    b2 = P[7:8, :E]

    # ---- packed QKV projection: one (M,E) @ (E,3E) matmul ------------------
    # 1/sqrt(dh) is folded into the Q columns of wqkv / bqkv in the wrapper.
    qkv = jnp.dot(xb, wqkv_ref[0], preferred_element_type=jnp.float32) + bqkv
    qkv3 = qkv.reshape(Bt, S, 3 * E)                   # split leading dim (free)

    # ---- multi-head attention: heads are static lane slices (no transposes)
    ctx_heads = []
    for h in range(nhead):                             # static unroll, H small
        off = h * dh
        qh = qkv3[:, :, off:off + dh].astype(jnp.bfloat16)              # (Bt,S,dh)
        kh = qkv3[:, :, E + off:E + off + dh].astype(jnp.bfloat16)
        vh = qkv3[:, :, 2 * E + off:2 * E + off + dh].astype(jnp.bfloat16)

        s = jnp.einsum('bqd,bkd->bqk', qh, kh,
                       preferred_element_type=jnp.float32)              # (Bt,S,S)
        s = s - jnp.max(s, axis=-1, keepdims=True)
        p = jnp.exp(s)
        p = p * pl.reciprocal(jnp.sum(p, axis=-1, keepdims=True), approx=True)

        ctx_heads.append(jnp.einsum('bqk,bkd->bqd', p.astype(jnp.bfloat16), vh,
                                    preferred_element_type=jnp.float32))

    # head-concat is a lane-concat (heads already in (b,q,d) order) -> single
    # full-width K=E output projection.
    ctx = jnp.concatenate(ctx_heads, axis=-1).reshape(M, E)
    attn = jnp.dot(ctx.astype(jnp.bfloat16), wo_ref[0],
                   preferred_element_type=jnp.float32) + bo

    # ---- residual + LayerNorm 1 (f32) --------------------------------------
    y = _layernorm(x + attn, ln1g, ln1b)

    # ---- feed-forward -------------------------------------------------------
    h1 = jnp.dot(y.astype(jnp.bfloat16), w1_ref[0],
                 preferred_element_type=jnp.float32) + b1
    h1 = jnp.maximum(h1, 0.0)                          # ReLU (PyTorch default)
    ff = jnp.dot(h1.astype(jnp.bfloat16), w2_ref[0],
                 preferred_element_type=jnp.float32) + b2

    # ---- residual + LayerNorm 2 (f32) --------------------------------------
    z = _layernorm(y + ff, ln2g, ln2b)
    acc_ref[...] = z

    # ---- finalize: optional global LayerNorm + store to HBM ----------------
    @pl.when(l == nlayers - 1)
    def _():
        out = z
        if apply_final_norm:
            out = _layernorm(out, fng_ref[...], fnb_ref[...])
        o_ref[...] = out.reshape(Bt, S, E).astype(o_ref.dtype)


# --------------------------------------------------------------------------
# Wrapper
# --------------------------------------------------------------------------
def _pick_block_b(B, S):
    """Largest divisor of B such that the activation block stays modest."""
    best = 1
    for bt in range(1, B + 1):
        if B % bt == 0 and bt * S <= 1024:
            best = bt
    return best


def transformer_encoder(src_sbe, stacked, nhead, final_norm=None, block_b=None):
    """src_sbe: (S, B, E) seq-first, as in nn.TransformerEncoder.

    stacked: dict of per-layer weights stacked along a leading L axis
             (wqkv (L,E,3E), bqkv (L,1,3E), wo (L,E,E), bo (L,1,E),
              ln1g/ln1b/ln2g/ln2b (L,1,E), w1 (L,E,F), b1 (L,1,F),
              w2 (L,F,E), b2 (L,1,E)), in x @ W (already-transposed) layout.
    """
    x = jnp.transpose(src_sbe, (1, 0, 2))              # (B, S, E)
    B, S, E = x.shape
    L = stacked["wqkv"].shape[0]
    F = stacked["w1"].shape[-1]
    assert E % nhead == 0
    dh = E // nhead

    Bt = _pick_block_b(B, S) if block_b is None else block_b
    assert B % Bt == 0

    apply_final_norm = final_norm is not None
    if apply_final_norm:
        fng, fnb = final_norm["g"], final_norm["b"]
    else:
        fng = jnp.ones((1, E), jnp.float32)
        fnb = jnp.zeros((1, E), jnp.float32)

    # Fold the 1/sqrt(dh) attention scale into the Q columns of wqkv / bqkv (free).
    scale = 1.0 / math.sqrt(dh)
    wqkv_f = stacked["wqkv"]
    wqkv_f = jnp.concatenate([wqkv_f[..., :E] * scale, wqkv_f[..., E:]], axis=-1)
    bqkv_f = stacked["bqkv"]
    bqkv_f = jnp.concatenate([bqkv_f[..., :E] * scale, bqkv_f[..., E:]], axis=-1)

    # bf16 MXU operands (f32 accumulation inside the kernel); halves weight DMA.
    wqkv = wqkv_f.astype(jnp.bfloat16)
    wo = stacked["wo"].astype(jnp.bfloat16)
    w1 = stacked["w1"].astype(jnp.bfloat16)
    w2 = stacked["w2"].astype(jnp.bfloat16)

    # Pack the 8 tiny per-layer params into one (L, 8, W) f32 array -> 1 DMA/layer.
    W = max(3 * E, F)

    def _pad(a):                                       # (L,1,w) -> (L,1,W)
        return jnp.pad(a.astype(jnp.float32), ((0, 0), (0, 0), (0, W - a.shape[-1])))

    packed = jnp.concatenate([
        _pad(bqkv_f), _pad(stacked["b1"]), _pad(stacked["bo"]),
        _pad(stacked["ln1g"]), _pad(stacked["ln1b"]),
        _pad(stacked["ln2g"]), _pad(stacked["ln2b"]), _pad(stacked["b2"]),
    ], axis=1)                                         # (L, 8, W)

    x_bf = x.astype(jnp.bfloat16)                      # halve input DMA / VMEM

    # Scoped-VMEM sizing from the double-buffered footprint (clamped to v7x's 64 MiB).
    w_bytes = 2 * (E * 3 * E + E * E + 2 * E * F)                 # bf16 weights, 1 layer
    act_bytes = Bt * S * E * (2 * 2 + 4 * 2 + 4)                  # x(bf16,2buf)+out(f32,2buf)+acc
    small_bytes = 2 * (8 * W * 4) + 2 * E * 4
    inter_bytes = Bt * S * (4 * E + F) * 4 + 2 * Bt * S * S * 4   # qkv/ffn/score headroom
    est = 2 * w_bytes + act_bytes + small_bytes + inter_bytes
    vmem_limit = int(min(64 * 2**20, max(32 * 2**20, 2 * est)))

    in_specs = [
        pl.BlockSpec((Bt, S, E), lambda b, l: (b, 0, 0)),          # x (resident over l)
        pl.BlockSpec((1, E, 3 * E), lambda b, l: (l, 0, 0)),       # wqkv
        pl.BlockSpec((1, E, E), lambda b, l: (l, 0, 0)),           # wo
        pl.BlockSpec((1, E, F), lambda b, l: (l, 0, 0)),           # w1
        pl.BlockSpec((1, F, E), lambda b, l: (l, 0, 0)),           # w2
        pl.BlockSpec((1, 8, W), lambda b, l: (l, 0, 0)),           # packed small params
        pl.BlockSpec((1, E), lambda b, l: (0, 0)),                 # final-norm gamma
        pl.BlockSpec((1, E), lambda b, l: (0, 0)),                 # final-norm beta
    ]

    out = pl.pallas_call(
        functools.partial(fused_encoder_kernel, nhead=nhead,
                          apply_final_norm=apply_final_norm),
        out_shape=jax.ShapeDtypeStruct((B, S, E), src_sbe.dtype),
        grid=(B // Bt, L),
        in_specs=in_specs,
        out_specs=pl.BlockSpec((Bt, S, E), lambda b, l: (b, 0, 0)),
        scratch_shapes=[pltpu.VMEM((Bt * S, E), jnp.float32)],
        compiler_params=pltpu.CompilerParams(
            dimension_semantics=("parallel", "arbitrary"),
            vmem_limit_bytes=vmem_limit),
    )(x_bf, wqkv, wo, w1, w2, packed, fng, fnb)

    return jnp.transpose(out, (1, 0, 2))               # back to (S, B, E)


# --------------------------------------------------------------------------
# Deterministic parameter construction
# --------------------------------------------------------------------------
def make_layer_params(key, d_model, dim_ff):
    ks = jax.random.split(key, 8)
    s = 0.05
    wq = jax.random.normal(ks[0], (d_model, d_model), jnp.float32) * s
    wk = jax.random.normal(ks[1], (d_model, d_model), jnp.float32) * s
    wv = jax.random.normal(ks[2], (d_model, d_model), jnp.float32) * s
    bq = jax.random.normal(ks[4], (1, d_model), jnp.float32) * s
    bk = jax.random.normal(ks[5], (1, d_model), jnp.float32) * s
    bv = jax.random.normal(ks[6], (1, d_model), jnp.float32) * s
    return {
        "wqkv": jnp.concatenate([wq, wk, wv], axis=1),     # (E, 3E)
        "bqkv": jnp.concatenate([bq, bk, bv], axis=1),     # (1, 3E)
        "wo": jax.random.normal(ks[3], (d_model, d_model), jnp.float32) * s,
        "bo": jnp.zeros((1, d_model), jnp.float32),
        "ln1g": jnp.ones((1, d_model), jnp.float32),
        "ln1b": jnp.zeros((1, d_model), jnp.float32),
        "ln2g": jnp.ones((1, d_model), jnp.float32),
        "ln2b": jnp.zeros((1, d_model), jnp.float32),
        "w1": jax.random.normal(ks[7], (d_model, dim_ff), jnp.float32) * s,
        "b1": jnp.zeros((1, dim_ff), jnp.float32),
        "w2": jax.random.normal(jax.random.fold_in(key, 99),
                                (dim_ff, d_model), jnp.float32) * s,
        "b2": jnp.zeros((1, d_model), jnp.float32),
    }


def stack_layer_params(layer_params):
    return {k: jnp.stack([p[k] for p in layer_params], axis=0)
            for k in layer_params[0]}


if __name__ == "__main__":
    S, B, E = 8, 2, 32          # seq, batch, d_model
    NHEAD, DFF, NLAYERS = 4, 64, 2

    root = jax.random.PRNGKey(0)
    k_src, *k_layers = jax.random.split(root, NLAYERS + 1)

    src = jax.random.normal(k_src, (S, B, E), jnp.float32)   # (S, B, E) seq-first
    layer_params = [make_layer_params(k, E, DFF) for k in k_layers]
    stacked = stack_layer_params(layer_params)
    final_norm = {"g": jnp.ones((1, E), jnp.float32),
                  "b": jnp.zeros((1, E), jnp.float32)}

    out = transformer_encoder(src, stacked, NHEAD, final_norm)
    out = jax.block_until_ready(out)
    assert out.shape == (S, B, E)
    assert jnp.all(jnp.isfinite(out))
    print("KERNEL_OK")
</pallas_src>

<mosaic_0001>
module attributes {stable_mosaic.version = 11 : i64} {
  func.func @fused_encoder_kernel(%arg0: i32, %arg1: i32, %arg2: memref<2x8x32xbf16, #tpu.memory_space<vmem>>, %arg3: memref<1x32x96xbf16, #tpu.memory_space<vmem>>, %arg4: memref<1x32x32xbf16, #tpu.memory_space<vmem>>, %arg5: memref<1x32x64xbf16, #tpu.memory_space<vmem>>, %arg6: memref<1x64x32xbf16, #tpu.memory_space<vmem>>, %arg7: memref<1x8x96xf32, #tpu.memory_space<vmem>>, %arg8: memref<1x32xf32, #tpu.memory_space<vmem>>, %arg9: memref<1x32xf32, #tpu.memory_space<vmem>>, %arg10: memref<2x8x32xf32, #tpu.memory_space<vmem>>, %arg11: memref<16x32xf32, #tpu.memory_space<vmem>>) attributes {dimension_semantics = [#tpu.dimension_semantics<parallel>, #tpu.dimension_semantics<arbitrary>], iteration_bounds = array<i64: 1, 2>, scalar_prefetch = 0 : i64, scratch_operands = 1 : i64, tpu.core_type = #tpu.core_type<tc>, window_params = [{transform_indices = @transform_0, window_bounds = array<i64: 2, 8, 32>}, {transform_indices = @transform_1, window_bounds = array<i64: 1, 32, 96>}, {transform_indices = @transform_2, window_bounds = array<i64: 1, 32, 32>}, {transform_indices = @transform_3, window_bounds = array<i64: 1, 32, 64>}, {transform_indices = @transform_4, window_bounds = array<i64: 1, 64, 32>}, {transform_indices = @transform_5, window_bounds = array<i64: 1, 8, 96>}, {pipeline_mode = #tpu.pipeline_mode<synchronous>, transform_indices = @transform_6, window_bounds = array<i64: 1, 32>}, {pipeline_mode = #tpu.pipeline_mode<synchronous>, transform_indices = @transform_7, window_bounds = array<i64: 1, 32>}, {transform_indices = @transform_8, window_bounds = array<i64: 2, 8, 32>}]} {
    %c0_i32 = arith.constant 0 : i32
    %0 = arith.cmpi eq, %arg1, %c0_i32 : i32
    %1 = arith.extui %0 : i1 to i32
    %c0_i32_0 = arith.constant 0 : i32
    %2 = arith.cmpi ne, %1, %c0_i32_0 : i32
    scf.if %2 {
      %c0_50 = arith.constant 0 : index
      %c0_51 = arith.constant 0 : index
      %c0_52 = arith.constant 0 : index
      %169 = vector.load %arg2[%c0_50, %c0_51, %c0_52] : memref<2x8x32xbf16, #tpu.memory_space<vmem>>, vector<2x8x32xbf16>
      %170 = vector.shape_cast %169 : vector<2x8x32xbf16> to vector<16x32xbf16>
      %171 = arith.extf %170 : vector<16x32xbf16> to vector<16x32xf32>
      %c0_53 = arith.constant 0 : index
      %c0_54 = arith.constant 0 : index
      %172 = vector.load %arg11[%c0_53, %c0_54] : memref<16x32xf32, #tpu.memory_space<vmem>>, vector<16x32xf32>
      tpu.vector_store %arg11[%c0_53, %c0_54], %171 {strides = array<i32>} : memref<16x32xf32, #tpu.memory_space<vmem>>, vector<16x32xf32>,
    } else {
    }
    %c0 = arith.constant 0 : index
    %c0_1 = arith.constant 0 : index
    %3 = vector.load %arg11[%c0, %c0_1] : memref<16x32xf32, #tpu.memory_space<vmem>>, vector<16x32xf32>
    %4 = arith.truncf %3 : vector<16x32xf32> to vector<16x32xbf16>
    %c0_2 = arith.constant 0 : index
    %c0_3 = arith.constant 0 : index
    %c0_4 = arith.constant 0 : index
    %5 = vector.load %arg7[%c0_2, %c0_3, %c0_4] : memref<1x8x96xf32, #tpu.memory_space<vmem>>, vector<1x8x96xf32>
    %6 = vector.shape_cast %5 : vector<1x8x96xf32> to vector<8x96xf32>
    %7 = vector.extract_strided_slice %6 {offsets = [0, 0], sizes = [1, 96], strides = [1, 1]} : vector<8x96xf32> to vector<1x96xf32>
    %8 = vector.extract_strided_slice %6 {offsets = [1, 0], sizes = [1, 64], strides = [1, 1]} : vector<8x96xf32> to vector<1x64xf32>
    %9 = vector.extract_strided_slice %6 {offsets = [2, 0], sizes = [1, 32], strides = [1, 1]} : vector<8x96xf32> to vector<1x32xf32>
    %10 = vector.extract_strided_slice %6 {offsets = [3, 0], sizes = [1, 32], strides = [1, 1]} : vector<8x96xf32> to vector<1x32xf32>
    %11 = vector.extract_strided_slice %6 {offsets = [4, 0], sizes = [1, 32], strides = [1, 1]} : vector<8x96xf32> to vector<1x32xf32>
    %12 = vector.extract_strided_slice %6 {offsets = [5, 0], sizes = [1, 32], strides = [1, 1]} : vector<8x96xf32> to vector<1x32xf32>
    %13 = vector.extract_strided_slice %6 {offsets = [6, 0], sizes = [1, 32], strides = [1, 1]} : vector<8x96xf32> to vector<1x32xf32>
    %14 = vector.extract_strided_slice %6 {offsets = [7, 0], sizes = [1, 32], strides = [1, 1]} : vector<8x96xf32> to vector<1x32xf32>
    %c0_5 = arith.constant 0 : index
    %c0_6 = arith.constant 0 : index
    %c0_7 = arith.constant 0 : index
    %15 = vector.load %arg3[%c0_5, %c0_6, %c0_7] : memref<1x32x96xbf16, #tpu.memory_space<vmem>>, vector<1x32x96xbf16>
    %16 = vector.shape_cast %15 : vector<1x32x96xbf16> to vector<32x96xbf16>
    %cst = arith.constant dense<0.000000e+00> : vector<16x96xf32>
    %17 = tpu.matmul %4, %16, %cst {dimension_numbers = #tpu.dot_dimension_numbers<[1], [0], [0], [1], [0, 0, 1, 1], [], []>} : vector<16x32xbf16>, vector<32x96xbf16>, vector<16x96xf32> -> vector<16x96xf32>
    %18 = vector.broadcast %7 : vector<1x96xf32> to vector<16x96xf32>
    %19 = arith.addf %17, %18 : vector<16x96xf32>
    %20 = vector.shape_cast %19 : vector<16x96xf32> to vector<2x8x96xf32>
    %21 = vector.extract_strided_slice %20 {offsets = [0, 0, 0], sizes = [2, 8, 8], strides = [1, 1, 1]} : vector<2x8x96xf32> to vector<2x8x8xf32>
    %22 = arith.truncf %21 : vector<2x8x8xf32> to vector<2x8x8xbf16>
    %23 = vector.extract_strided_slice %20 {offsets = [0, 0, 32], sizes = [2, 8, 8], strides = [1, 1, 1]} : vector<2x8x96xf32> to vector<2x8x8xf32>
    %24 = arith.truncf %23 : vector<2x8x8xf32> to vector<2x8x8xbf16>
    %25 = vector.extract_strided_slice %20 {offsets = [0, 0, 64], sizes = [2, 8, 8], strides = [1, 1, 1]} : vector<2x8x96xf32> to vector<2x8x8xf32>
    %26 = arith.truncf %25 : vector<2x8x8xf32> to vector<2x8x8xbf16>
    "tpu.trace_start"() <{level = 10 : i32, message = "bqd,bkd->bqk"}> : () -> ()
    %cst_8 = arith.constant dense<0.000000e+00> : vector<2x8x8xf32>
    %27 = tpu.matmul %22, %24, %cst_8 {dimension_numbers = #tpu.dot_dimension_numbers<[2], [2], [1], [1], [0, 0, 0, 1, 1, 1], [0], [0]>} : vector<2x8x8xbf16>, vector<2x8x8xbf16>, vector<2x8x8xf32> -> vector<2x8x8xf32>
    "tpu.trace_stop"() : () -> ()
    %cst_9 = arith.constant dense<0xFF800000> : vector<2x8xf32>
    %28 = vector.multi_reduction <maximumf>, %27, %cst_9 [2] : vector<2x8x8xf32> to vector<2x8xf32>
    %29 = vector.shape_cast %28 : vector<2x8xf32> to vector<2x8x1xf32>
    %30 = vector.broadcast %29 : vector<2x8x1xf32> to vector<2x8x8xf32>
    %31 = arith.subf %27, %30 : vector<2x8x8xf32>
    %32 = math.exp %31 : vector<2x8x8xf32>
    %cst_10 = arith.constant dense<0.000000e+00> : vector<2x8xf32>
    %33 = vector.multi_reduction <add>, %32, %cst_10 [2] : vector<2x8x8xf32> to vector<2x8xf32>
    %34 = vector.shape_cast %33 : vector<2x8xf32> to vector<2x8x1xf32>
    %35 = tpu.reciprocal %34 {approx = true} : vector<2x8x1xf32> -> vector<2x8x1xf32>
    %36 = vector.broadcast %35 : vector<2x8x1xf32> to vector<2x8x8xf32>
    %37 = arith.mulf %32, %36 : vector<2x8x8xf32>
    %38 = arith.truncf %37 : vector<2x8x8xf32> to vector<2x8x8xbf16>
    "tpu.trace_start"() <{level = 10 : i32, message = "bqk,bkd->bqd"}> : () -> ()
    %cst_11 = arith.constant dense<0.000000e+00> : vector<2x8x8xf32>
    %39 = tpu.matmul %38, %26, %cst_11 {dimension_numbers = #tpu.dot_dimension_numbers<[2], [1], [1], [2], [0, 0, 0, 1, 1, 2], [0], [0]>} : vector<2x8x8xbf16>, vector<2x8x8xbf16>, vector<2x8x8xf32> -> vector<2x8x8xf32>
    "tpu.trace_stop"() : () -> ()
    %40 = vector.extract_strided_slice %20 {offsets = [0, 0, 8], sizes = [2, 8, 8], strides = [1, 1, 1]} : vector<2x8x96xf32> to vector<2x8x8xf32>
    %41 = arith.truncf %40 : vector<2x8x8xf32> to vector<2x8x8xbf16>
    %42 = vector.extract_strided_slice %20 {offsets = [0, 0, 40], sizes = [2, 8, 8], strides = [1, 1, 1]} : vector<2x8x96xf32> to vector<2x8x8xf32>
    %43 = arith.truncf %42 : vector<2x8x8xf32> to vector<2x8x8xbf16>
    %44 = vector.extract_strided_slice %20 {offsets = [0, 0, 72], sizes = [2, 8, 8], strides = [1, 1, 1]} : vector<2x8x96xf32> to vector<2x8x8xf32>
    %45 = arith.truncf %44 : vector<2x8x8xf32> to vector<2x8x8xbf16>
    "tpu.trace_start"() <{level = 10 : i32, message = "bqd,bkd->bqk"}> : () -> ()
    %cst_12 = arith.constant dense<0.000000e+00> : vector<2x8x8xf32>
    %46 = tpu.matmul %41, %43, %cst_12 {dimension_numbers = #tpu.dot_dimension_numbers<[2], [2], [1], [1], [0, 0, 0, 1, 1, 1], [0], [0]>} : vector<2x8x8xbf16>, vector<2x8x8xbf16>, vector<2x8x8xf32> -> vector<2x8x8xf32>
    "tpu.trace_stop"() : () -> ()
    %cst_13 = arith.constant dense<0xFF800000> : vector<2x8xf32>
    %47 = vector.multi_reduction <maximumf>, %46, %cst_13 [2] : vector<2x8x8xf32> to vector<2x8xf32>
    %48 = vector.shape_cast %47 : vector<2x8xf32> to vector<2x8x1xf32>
    %49 = vector.broadcast %48 : vector<2x8x1xf32> to vector<2x8x8xf32>
    %50 = arith.subf %46, %49 : vector<2x8x8xf32>
    %51 = math.exp %50 : vector<2x8x8xf32>
    %cst_14 = arith.constant dense<0.000000e+00> : vector<2x8xf32>
    %52 = vector.multi_reduction <add>, %51, %cst_14 [2] : vector<2x8x8xf32> to vector<2x8xf32>
    %53 = vector.shape_cast %52 : vector<2x8xf32> to vector<2x8x1xf32>
    %54 = tpu.reciprocal %53 {approx = true} : vector<2x8x1xf32> -> vector<2x8x1xf32>
    %55 = vector.broadcast %54 : vector<2x8x1xf32> to vector<2x8x8xf32>
    %56 = arith.mulf %51, %55 : vector<2x8x8xf32>
    %57 = arith.truncf %56 : vector<2x8x8xf32> to vector<2x8x8xbf16>
    "tpu.trace_start"() <{level = 10 : i32, message = "bqk,bkd->bqd"}> : () -> ()
    %cst_15 = arith.constant dense<0.000000e+00> : vector<2x8x8xf32>
    %58 = tpu.matmul %57, %45, %cst_15 {dimension_numbers = #tpu.dot_dimension_numbers<[2], [1], [1], [2], [0, 0, 0, 1, 1, 2], [0], [0]>} : vector<2x8x8xbf16>, vector<2x8x8xbf16>, vector<2x8x8xf32> -> vector<2x8x8xf32>
    "tpu.trace_stop"() : () -> ()
    %59 = vector.extract_strided_slice %20 {offsets = [0, 0, 16], sizes = [2, 8, 8], strides = [1, 1, 1]} : vector<2x8x96xf32> to vector<2x8x8xf32>
    %60 = arith.truncf %59 : vector<2x8x8xf32> to vector<2x8x8xbf16>
    %61 = vector.extract_strided_slice %20 {offsets = [0, 0, 48], sizes = [2, 8, 8], strides = [1, 1, 1]} : vector<2x8x96xf32> to vector<2x8x8xf32>
    %62 = arith.truncf %61 : vector<2x8x8xf32> to vector<2x8x8xbf16>
    %63 = vector.extract_strided_slice %20 {offsets = [0, 0, 80], sizes = [2, 8, 8], strides = [1, 1, 1]} : vector<2x8x96xf32> to vector<2x8x8xf32>
    %64 = arith.truncf %63 : vector<2x8x8xf32> to vector<2x8x8xbf16>
    "tpu.trace_start"() <{level = 10 : i32, message = "bqd,bkd->bqk"}> : () -> ()
    %cst_16 = arith.constant dense<0.000000e+00> : vector<2x8x8xf32>
    %65 = tpu.matmul %60, %62, %cst_16 {dimension_numbers = #tpu.dot_dimension_numbers<[2], [2], [1], [1], [0, 0, 0, 1, 1, 1], [0], [0]>} : vector<2x8x8xbf16>, vector<2x8x8xbf16>, vector<2x8x8xf32> -> vector<2x8x8xf32>
    "tpu.trace_stop"() : () -> ()
    %cst_17 = arith.constant dense<0xFF800000> : vector<2x8xf32>
    %66 = vector.multi_reduction <maximumf>, %65, %cst_17 [2] : vector<2x8x8xf32> to vector<2x8xf32>
    %67 = vector.shape_cast %66 : vector<2x8xf32> to vector<2x8x1xf32>
    %68 = vector.broadcast %67 : vector<2x8x1xf32> to vector<2x8x8xf32>
    %69 = arith.subf %65, %68 : vector<2x8x8xf32>
    %70 = math.exp %69 : vector<2x8x8xf32>
    %cst_18 = arith.constant dense<0.000000e+00> : vector<2x8xf32>
    %71 = vector.multi_reduction <add>, %70, %cst_18 [2] : vector<2x8x8xf32> to vector<2x8xf32>
    %72 = vector.shape_cast %71 : vector<2x8xf32> to vector<2x8x1xf32>
    %73 = tpu.reciprocal %72 {approx = true} : vector<2x8x1xf32> -> vector<2x8x1xf32>
    %74 = vector.broadcast %73 : vector<2x8x1xf32> to vector<2x8x8xf32>
    %75 = arith.mulf %70, %74 : vector<2x8x8xf32>
    %76 = arith.truncf %75 : vector<2x8x8xf32> to vector<2x8x8xbf16>
    "tpu.trace_start"() <{level = 10 : i32, message = "bqk,bkd->bqd"}> : () -> ()
    %cst_19 = arith.constant dense<0.000000e+00> : vector<2x8x8xf32>
    %77 = tpu.matmul %76, %64, %cst_19 {dimension_numbers = #tpu.dot_dimension_numbers<[2], [1], [1], [2], [0, 0, 0, 1, 1, 2], [0], [0]>} : vector<2x8x8xbf16>, vector<2x8x8xbf16>, vector<2x8x8xf32> -> vector<2x8x8xf32>
    "tpu.trace_stop"() : () -> ()
    %78 = vector.extract_strided_slice %20 {offsets = [0, 0, 24], sizes = [2, 8, 8], strides = [1, 1, 1]} : vector<2x8x96xf32> to vector<2x8x8xf32>
    %79 = arith.truncf %78 : vector<2x8x8xf32> to vector<2x8x8xbf16>
    %80 = vector.extract_strided_slice %20 {offsets = [0, 0, 56], sizes = [2, 8, 8], strides = [1, 1, 1]} : vector<2x8x96xf32> to vector<2x8x8xf32>
    %81 = arith.truncf %80 : vector<2x8x8xf32> to vector<2x8x8xbf16>
    %82 = vector.extract_strided_slice %20 {offsets = [0, 0, 88], sizes = [2, 8, 8], strides = [1, 1, 1]} : vector<2x8x96xf32> to vector<2x8x8xf32>
    %83 = arith.truncf %82 : vector<2x8x8xf32> to vector<2x8x8xbf16>
    "tpu.trace_start"() <{level = 10 : i32, message = "bqd,bkd->bqk"}> : () -> ()
    %cst_20 = arith.constant dense<0.000000e+00> : vector<2x8x8xf32>
    %84 = tpu.matmul %79, %81, %cst_20 {dimension_numbers = #tpu.dot_dimension_numbers<[2], [2], [1], [1], [0, 0, 0, 1, 1, 1], [0], [0]>} : vector<2x8x8xbf16>, vector<2x8x8xbf16>, vector<2x8x8xf32> -> vector<2x8x8xf32>
    "tpu.trace_stop"() : () -> ()
    %cst_21 = arith.constant dense<0xFF800000> : vector<2x8xf32>
    %85 = vector.multi_reduction <maximumf>, %84, %cst_21 [2] : vector<2x8x8xf32> to vector<2x8xf32>
    %86 = vector.shape_cast %85 : vector<2x8xf32> to vector<2x8x1xf32>
    %87 = vector.broadcast %86 : vector<2x8x1xf32> to vector<2x8x8xf32>
    %88 = arith.subf %84, %87 : vector<2x8x8xf32>
    %89 = math.exp %88 : vector<2x8x8xf32>
    %cst_22 = arith.constant dense<0.000000e+00> : vector<2x8xf32>
    %90 = vector.multi_reduction <add>, %89, %cst_22 [2] : vector<2x8x8xf32> to vector<2x8xf32>
    %91 = vector.shape_cast %90 : vector<2x8xf32> to vector<2x8x1xf32>
    %92 = tpu.reciprocal %91 {approx = true} : vector<2x8x1xf32> -> vector<2x8x1xf32>
    %93 = vector.broadcast %92 : vector<2x8x1xf32> to vector<2x8x8xf32>
    %94 = arith.mulf %89, %93 : vector<2x8x8xf32>
    %95 = arith.truncf %94 : vector<2x8x8xf32> to vector<2x8x8xbf16>
    "tpu.trace_start"() <{level = 10 : i32, message = "bqk,bkd->bqd"}> : () -> ()
    %cst_23 = arith.constant dense<0.000000e+00> : vector<2x8x8xf32>
    %96 = tpu.matmul %95, %83, %cst_23 {dimension_numbers = #tpu.dot_dimension_numbers<[2], [1], [1], [2], [0, 0, 0, 1, 1, 2], [0], [0]>} : vector<2x8x8xbf16>, vector<2x8x8xbf16>, vector<2x8x8xf32> -> vector<2x8x8xf32>
    "tpu.trace_stop"() : () -> ()
    %97 = tpu.concatenate %39, %58, %77, %96 in 2 : vector<2x8x8xf32>, vector<2x8x8xf32>, vector<2x8x8xf32>, vector<2x8x8xf32> -> vector<2x8x32xf32>
    %98 = vector.shape_cast %97 : vector<2x8x32xf32> to vector<16x32xf32>
    %99 = arith.truncf %98 : vector<16x32xf32> to vector<16x32xbf16>
    %c0_24 = arith.constant 0 : index
    %c0_25 = arith.constant 0 : index
    %c0_26 = arith.constant 0 : index
    %100 = vector.load %arg4[%c0_24, %c0_25, %c0_26] : memref<1x32x32xbf16, #tpu.memory_space<vmem>>, vector<1x32x32xbf16>
    %101 = vector.shape_cast %100 : vector<1x32x32xbf16> to vector<32x32xbf16>
    %cst_27 = arith.constant dense<0.000000e+00> : vector<16x32xf32>
    %102 = tpu.matmul %99, %101, %cst_27 {dimension_numbers = #tpu.dot_dimension_numbers<[1], [0], [0], [1], [0, 0, 1, 1], [], []>} : vector<16x32xbf16>, vector<32x32xbf16>, vector<16x32xf32> -> vector<16x32xf32>
    %103 = vector.broadcast %9 : vector<1x32xf32> to vector<16x32xf32>
    %104 = arith.addf %102, %103 : vector<16x32xf32>
    %105 = arith.addf %3, %104 : vector<16x32xf32>
    %cst_28 = arith.constant dense<0.000000e+00> : vector<16xf32>
    %106 = vector.multi_reduction <add>, %105, %cst_28 [1] : vector<16x32xf32> to vector<16xf32>
    %107 = vector.shape_cast %106 : vector<16xf32> to vector<16x1xf32>
    %cst_29 = arith.constant 3.200000e+01 : f32
    %108 = vector.broadcast %cst_29 : f32 to vector<16x1xf32>
    %109 = arith.divf %107, %108 : vector<16x1xf32>
    %110 = vector.broadcast %109 : vector<16x1xf32> to vector<16x32xf32>
    %111 = arith.subf %105, %110 : vector<16x32xf32>
    %112 = arith.mulf %111, %111 : vector<16x32xf32>
    %cst_30 = arith.constant dense<0.000000e+00> : vector<16xf32>
    %113 = vector.multi_reduction <add>, %112, %cst_30 [1] : vector<16x32xf32> to vector<16xf32>
    %114 = vector.shape_cast %113 : vector<16xf32> to vector<16x1xf32>
    %cst_31 = arith.constant 3.200000e+01 : f32
    %115 = vector.broadcast %cst_31 : f32 to vector<16x1xf32>
    %116 = arith.divf %114, %115 : vector<16x1xf32>
    %117 = vector.broadcast %109 : vector<16x1xf32> to vector<16x32xf32>
    %118 = arith.subf %105, %117 : vector<16x32xf32>
    %cst_32 = arith.constant 9.99999974E-6 : f32
    %119 = vector.broadcast %cst_32 : f32 to vector<16x1xf32>
    %120 = arith.addf %116, %119 : vector<16x1xf32>
    %121 = math.rsqrt %120 : vector<16x1xf32>
    %122 = vector.broadcast %121 : vector<16x1xf32> to vector<16x32xf32>
    %123 = arith.mulf %118, %122 : vector<16x32xf32>
    %124 = vector.broadcast %10 : vector<1x32xf32> to vector<16x32xf32>
    %125 = arith.mulf %123, %124 : vector<16x32xf32>
    %126 = vector.broadcast %11 : vector<1x32xf32> to vector<16x32xf32>
    %127 = arith.addf %125, %126 : vector<16x32xf32>
    %128 = arith.truncf %127 : vector<16x32xf32> to vector<16x32xbf16>
    %c0_33 = arith.constant 0 : index
    %c0_34 = arith.constant 0 : index
    %c0_35 = arith.constant 0 : index
    %129 = vector.load %arg5[%c0_33, %c0_34, %c0_35] : memref<1x32x64xbf16, #tpu.memory_space<vmem>>, vector<1x32x64xbf16>
    %130 = vector.shape_cast %129 : vector<1x32x64xbf16> to vector<32x64xbf16>
    %cst_36 = arith.constant dense<0.000000e+00> : vector<16x64xf32>
    %131 = tpu.matmul %128, %130, %cst_36 {dimension_numbers = #tpu.dot_dimension_numbers<[1], [0], [0], [1], [0, 0, 1, 1], [], []>} : vector<16x32xbf16>, vector<32x64xbf16>, vector<16x64xf32> -> vector<16x64xf32>
    %132 = vector.broadcast %8 : vector<1x64xf32> to vector<16x64xf32>
    %133 = arith.addf %131, %132 : vector<16x64xf32>
    %cst_37 = arith.constant 0.000000e+00 : f32
    %134 = vector.broadcast %cst_37 : f32 to vector<16x64xf32>
    %135 = arith.maximumf %133, %134 : vector<16x64xf32>
    %136 = arith.truncf %135 : vector<16x64xf32> to vector<16x64xbf16>
    %c0_38 = arith.constant 0 : index
    %c0_39 = arith.constant 0 : index
    %c0_40 = arith.constant 0 : index
    %137 = vector.load %arg6[%c0_38, %c0_39, %c0_40] : memref<1x64x32xbf16, #tpu.memory_space<vmem>>, vector<1x64x32xbf16>
    %138 = vector.shape_cast %137 : vector<1x64x32xbf16> to vector<64x32xbf16>
    %cst_41 = arith.constant dense<0.000000e+00> : vector<16x32xf32>
    %139 = tpu.matmul %136, %138, %cst_41 {dimension_numbers = #tpu.dot_dimension_numbers<[1], [0], [0], [1], [0, 0, 1, 1], [], []>} : vector<16x64xbf16>, vector<64x32xbf16>, vector<16x32xf32> -> vector<16x32xf32>
    %140 = vector.broadcast %14 : vector<1x32xf32> to vector<16x32xf32>
    %141 = arith.addf %139, %140 : vector<16x32xf32>
    %142 = arith.addf %127, %141 : vector<16x32xf32>
    %cst_42 = arith.constant dense<0.000000e+00> : vector<16xf32>
    %143 = vector.multi_reduction <add>, %142, %cst_42 [1] : vector<16x32xf32> to vector<16xf32>
    %144 = vector.shape_cast %143 : vector<16xf32> to vector<16x1xf32>
    %cst_43 = arith.constant 3.200000e+01 : f32
    %145 = vector.broadcast %cst_43 : f32 to vector<16x1xf32>
    %146 = arith.divf %144, %145 : vector<16x1xf32>
    %147 = vector.broadcast %146 : vector<16x1xf32> to vector<16x32xf32>
    %148 = arith.subf %142, %147 : vector<16x32xf32>
    %149 = arith.mulf %148, %148 : vector<16x32xf32>
    %cst_44 = arith.constant dense<0.000000e+00> : vector<16xf32>
    %150 = vector.multi_reduction <add>, %149, %cst_44 [1] : vector<16x32xf32> to vector<16xf32>
    %151 = vector.shape_cast %150 : vector<16xf32> to vector<16x1xf32>
    %cst_45 = arith.constant 3.200000e+01 : f32
    %152 = vector.broadcast %cst_45 : f32 to vector<16x1xf32>
    %153 = arith.divf %151, %152 : vector<16x1xf32>
    %154 = vector.broadcast %146 : vector<16x1xf32> to vector<16x32xf32>
    %155 = arith.subf %142, %154 : vector<16x32xf32>
    %cst_46 = arith.constant 9.99999974E-6 : f32
    %156 = vector.broadcast %cst_46 : f32 to vector<16x1xf32>
    %157 = arith.addf %153, %156 : vector<16x1xf32>
    %158 = math.rsqrt %157 : vector<16x1xf32>
    %159 = vector.broadcast %158 : vector<16x1xf32> to vector<16x32xf32>
    %160 = arith.mulf %155, %159 : vector<16x32xf32>
    %161 = vector.broadcast %12 : vector<1x32xf32> to vector<16x32xf32>
    %162 = arith.mulf %160, %161 : vector<16x32xf32>
    %163 = vector.broadcast %13 : vector<1x32xf32> to vector<16x32xf32>
    %164 = arith.addf %162, %163 : vector<16x32xf32>
    %c0_47 = arith.constant 0 : index
    %c0_48 = arith.constant 0 : index
    %165 = vector.load %arg11[%c0_47, %c0_48] : memref<16x32xf32, #tpu.memory_space<vmem>>, vector<16x32xf32>
    tpu.vector_store %arg11[%c0_47, %c0_48], %164 {strides = array<i32>} : memref<16x32xf32, #tpu.memory_space<vmem>>, vector<16x32xf32>,
    %c1_i32 = arith.constant 1 : i32
    %166 = arith.cmpi eq, %arg1, %c1_i32 : i32
    %167 = arith.extui %166 : i1 to i32
    %c0_i32_49 = arith.constant 0 : i32
    %168 = arith.cmpi ne, %167, %c0_i32_49 : i32
    scf.if %168 {
      %c0_50 = arith.constant 0 : index
      %c0_51 = arith.constant 0 : index
      %169 = vector.load %arg8[%c0_50, %c0_51] : memref<1x32xf32, #tpu.memory_space<vmem>>, vector<1x32xf32>
      %c0_52 = arith.constant 0 : index
      %c0_53 = arith.constant 0 : index
      %170 = vector.load %arg9[%c0_52, %c0_53] : memref<1x32xf32, #tpu.memory_space<vmem>>, vector<1x32xf32>
      %cst_54 = arith.constant dense<0.000000e+00> : vector<16xf32>
      %171 = vector.multi_reduction <add>, %164, %cst_54 [1] : vector<16x32xf32> to vector<16xf32>
      %172 = vector.shape_cast %171 : vector<16xf32> to vector<16x1xf32>
      %cst_55 = arith.constant 3.200000e+01 : f32
      %173 = vector.broadcast %cst_55 : f32 to vector<16x1xf32>
      %174 = arith.divf %172, %173 : vector<16x1xf32>
      %175 = vector.broadcast %174 : vector<16x1xf32> to vector<16x32xf32>
      %176 = arith.subf %164, %175 : vector<16x32xf32>
      %177 = arith.mulf %176, %176 : vector<16x32xf32>
      %cst_56 = arith.constant dense<0.000000e+00> : vector<16xf32>
      %178 = vector.multi_reduction <add>, %177, %cst_56 [1] : vector<16x32xf32> to vector<16xf32>
      %179 = vector.shape_cast %178 : vector<16xf32> to vector<16x1xf32>
      %cst_57 = arith.constant 3.200000e+01 : f32
      %180 = vector.broadcast %cst_57 : f32 to vector<16x1xf32>
      %181 = arith.divf %179, %180 : vector<16x1xf32>
      %182 = vector.broadcast %174 : vector<16x1xf32> to vector<16x32xf32>
      %183 = arith.subf %164, %182 : vector<16x32xf32>
      %cst_58 = arith.constant 9.99999974E-6 : f32
      %184 = vector.broadcast %cst_58 : f32 to vector<16x1xf32>
      %185 = arith.addf %181, %184 : vector<16x1xf32>
      %186 = math.rsqrt %185 : vector<16x1xf32>
      %187 = vector.broadcast %186 : vector<16x1xf32> to vector<16x32xf32>
      %188 = arith.mulf %183, %187 : vector<16x32xf32>
      %189 = vector.broadcast %169 : vector<1x32xf32> to vector<16x32xf32>
      %190 = arith.mulf %188, %189 : vector<16x32xf32>
      %191 = vector.broadcast %170 : vector<1x32xf32> to vector<16x32xf32>
      %192 = arith.addf %190, %191 : vector<16x32xf32>
      %193 = vector.shape_cast %192 : vector<16x32xf32> to vector<2x8x32xf32>
      %c0_59 = arith.constant 0 : index
      %c0_60 = arith.constant 0 : index
      %c0_61 = arith.constant 0 : index
      %194 = vector.load %arg10[%c0_59, %c0_60, %c0_61] : memref<2x8x32xf32, #tpu.memory_space<vmem>>, vector<2x8x32xf32>
      tpu.vector_store %arg10[%c0_59, %c0_60, %c0_61], %193 {strides = array<i32>} : memref<2x8x32xf32, #tpu.memory_space<vmem>>, vector<2x8x32xf32>,
    } else {
    }
    return
  }
  func.func @transform_0(%arg0: i32, %arg1: i32) -> (i32, i32, i32) {
    %c0_i32 = arith.constant 0 : i32
    %c0_i32_0 = arith.constant 0 : i32
    %c0_i32_1 = arith.constant 0 : i32
    return %arg0, %c0_i32, %c0_i32_0 : i32, i32, i32
  }
  func.func @transform_1(%arg0: i32, %arg1: i32) -> (i32, i32, i32) {
    %c0_i32 = arith.constant 0 : i32
    %c0_i32_0 = arith.constant 0 : i32
    %c0_i32_1 = arith.constant 0 : i32
    return %arg1, %c0_i32, %c0_i32_0 : i32, i32, i32
  }
  func.func @transform_2(%arg0: i32, %arg1: i32) -> (i32, i32, i32) {
    %c0_i32 = arith.constant 0 : i32
    %c0_i32_0 = arith.constant 0 : i32
    %c0_i32_1 = arith.constant 0 : i32
    return %arg1, %c0_i32, %c0_i32_0 : i32, i32, i32
  }
  func.func @transform_3(%arg0: i32, %arg1: i32) -> (i32, i32, i32) {
    %c0_i32 = arith.constant 0 : i32
    %c0_i32_0 = arith.constant 0 : i32
    %c0_i32_1 = arith.constant 0 : i32
    return %arg1, %c0_i32, %c0_i32_0 : i32, i32, i32
  }
  func.func @transform_4(%arg0: i32, %arg1: i32) -> (i32, i32, i32) {
    %c0_i32 = arith.constant 0 : i32
    %c0_i32_0 = arith.constant 0 : i32
    %c0_i32_1 = arith.constant 0 : i32
    return %arg1, %c0_i32, %c0_i32_0 : i32, i32, i32
  }
  func.func @transform_5(%arg0: i32, %arg1: i32) -> (i32, i32, i32) {
    %c0_i32 = arith.constant 0 : i32
    %c0_i32_0 = arith.constant 0 : i32
    %c0_i32_1 = arith.constant 0 : i32
    return %arg1, %c0_i32, %c0_i32_0 : i32, i32, i32
  }
  func.func @transform_6(%arg0: i32, %arg1: i32) -> (i32, i32) {
    %c0_i32 = arith.constant 0 : i32
    %c0_i32_0 = arith.constant 0 : i32
    %c0_i32_1 = arith.constant 0 : i32
    return %c0_i32, %c0_i32_0 : i32, i32
  }
  func.func @transform_7(%arg0: i32, %arg1: i32) -> (i32, i32) {
    %c0_i32 = arith.constant 0 : i32
    %c0_i32_0 = arith.constant 0 : i32
    %c0_i32_1 = arith.constant 0 : i32
    return %c0_i32, %c0_i32_0 : i32, i32
  }
  func.func @transform_8(%arg0: i32, %arg1: i32) -> (i32, i32, i32) {
    %c0_i32 = arith.constant 0 : i32
    %c0_i32_0 = arith.constant 0 : i32
    %c0_i32_1 = arith.constant 0 : i32
    return %arg0, %c0_i32, %c0_i32_0 : i32, i32, i32
  }
}

</mosaic_0001>

<llo_original>
// kernel: tpu_custom_call.1
$region0: #{tpu_custom_call.1}
  #allocation0 [shape = 'u32[]', space=smem, size = 0x4, offset = 0x4, fixed_abs, tag = 'smem constant byte address 0x4 - core index']
  #allocation1 [shape = 'u32[144,128]{1,0:T(1,128)}', space=vmem, size = 0x12000, scoped, tag = 'internal scratch']
  #allocation2 [shape = 'f32[16,32]{1,0:T(8,128)}', space=vmem, size = 0x2000, scoped, tag = 'scratch operand']
  %s0 = inlined_call_operand.hbm [shape: bf16[2,8,32], index: 0, kind: input, shape index: {}]
  %s1 = inlined_call_operand.vmem [shape: bf16[2,32,96], index: 1, kind: input, shape index: {}]
  %s2 = inlined_call_operand.vmem [shape: bf16[2,32,32], index: 2, kind: input, shape index: {}]
  %s3 = inlined_call_operand.vmem [shape: bf16[2,32,64], index: 3, kind: input, shape index: {}]
  %s4 = inlined_call_operand.vmem [shape: bf16[2,64,32], index: 4, kind: input, shape index: {}]
  %s5 = inlined_call_operand.hbm [shape: f32[2,8,96], index: 5, kind: input, shape index: {}]
  %s6 = inlined_call_operand.vmem [shape: f32[1,32], index: 6, kind: input, shape index: {}]
  %s7 = inlined_call_operand.vmem [shape: f32[1,32], index: 7, kind: input, shape index: {}]
  %s8 = inlined_call_operand.hbm [shape: f32[2,8,32], index: 8, kind: output, shape index: {}]
  %s9 = sld [smem:[#allocation0]]
  $region81: #{tpu_custom_call.1} parent=0
    _
  %s11 = ssub.s32 1, %s9
  %s12 = scalar_select 0, %s11, %s9
  $region1: #{tpu_custom_call.1} parent=0
    #allocation3 [shape = 'u8[4096]{0}', space=vmem, size = 0x1000, scoped, tag = 'input window, operand 0, single buffered']
    #allocation4 [shape = 's32[2]{0}', space=sflag, size = 0x8, scoped, tag = 'scoped memory for tpu_custom_call.1']
    #allocation5 [shape = 's32[2]{0}', space=sflag, size = 0x8, scoped, tag = 'scoped memory for tpu_custom_call.1']
    #allocation6 [shape = 'u8[8192]{0}', space=vmem, size = 0x2000, scoped, tag = 'input window, operand 5']
    #allocation7 [shape = 's32[2]{0}', space=sflag, size = 0x8, scoped, tag = 'scoped memory for tpu_custom_call.1']
    #allocation8 [shape = 'u8[8192]{0}', space=vmem, size = 0x2000, scoped, tag = 'output window, operand 0, single buffered']
    %13 = vsyncpa [#allocation4], 0
    %14 = vsyncpa [#allocation7], 0
    %s15 = scalar_lea.sflag [#allocation7], 1
    %16 = vsyncpa %s15, 0
    %17 = vsyncpa [#allocation5], 0
    loop: start=0, step=1, limit=4
    $region2: #{tpu_custom_call.1} parent=1 // loop_pre_header
      _
    $region3: #{tpu_custom_call.1} parent=1 // loop_header
      %s19 = sphi 0, %s23
      %p20 = scmp.ge.s32.totalorder %s19, 4
      %s26 = sphi 0, %s38
      %s27 = sphi 0, %s34
      %s28 = sphi 0, %s26
      %s29 = sphi 0, %s27
      %s30 = sphi 0, %s28
      %s31 = sphi 0, %s29
      %s41 = sphi 0, %s43
      %s44 = sphi 0, %s41
      %s45 = sphi 0, %s44
      %s61 = sphi 0, %s45
      %s67 = sphi 0, %s69
      %s70 = sphi 0, %s67
      %s71 = sphi 0, %s70
      %s87 = sphi 0, %s71
      %s93 = sphi 0, %s95
      %s96 = sphi 0, %s93
      %s97 = sphi 0, %s96
      %s113 = sphi 0, %s97
      %s119 = sphi 0, %s121
      %s122 = sphi 0, %s119
      %s123 = sphi 0, %s122
      %s139 = sphi 0, %s123
      %s145 = sphi 0, %s147
      %s148 = sphi 0, %s145
      %s149 = sphi 0, %s148
      %s165 = sphi 0, %s149
      %s171 = sphi 0, %s173
      %s174 = sphi 0, %s171
      %s175 = sphi 0, %s174
      %s191 = sphi 0, %s175
      %s195 = sphi 0, %s195
      %s197 = sphi 0, %s195
      %s198 = sphi 0, %s197
      %s212 = sphi 0, %s198
      %s216 = sphi 0, %s216
      %s218 = sphi 0, %s216
      %s219 = sphi 0, %s218
      %s233 = sphi 0, %s219
      %s239 = sphi 0, %s241
      %s242 = sphi 0, %s239
      %s243 = sphi 0, %s242
      %s259 = sphi 0, %s243
    $region4: #{tpu_custom_call.1} parent=1 // loop_header_branch
      %22 = sbr.rel (%p20) target = $region8
    $region5: #{tpu_custom_call.1} parent=1 // loop_body
      %s24 = ssub.s32 %s19, 1
      %s25 = ssub.s32 %s19, 2
      %s32 = sadd.s32 1, %s27
      %p33 = scmp.ge.s32.totalorder %s32, 2
      %s34 = scalar_select %p33, 0, %s32
      %s35 = sadd.s32 1, %s26
      %s36 = scalar_select %p33, %s35, %s26
      %p37 = scmp.ge.s32.totalorder %s36, 1
      %s38 = scalar_select %p37, 0, %s36
      %s39 = ssub.s32 %s26, %s38
      %p40 = scmp.eq.s32.totalorder %s39, 0
      %s42 = sadd.s32 %s41, 1
      %s43 = scalar_select %p40, %s41, %s42
      %p46 = pneg %p40
      %p47 = scmp.eq.s32.totalorder %s19, 1
      %p48 = por %p46, %p47
      %p49 = scmp.ne.s32.totalorder %s41, %s44
      %p50 = scmp.eq.s32.totalorder %s19, 0
      %p51 = por %p49, %p50
      %p52 = scmp.ne.s32.totalorder %s41, %s44
      %p53 = scmp.eq.s32.totalorder %s24, 1
      %p54 = por %p52, %p53
      %p55 = scmp.ne.s32.totalorder %s44, %s45
      %p56 = scmp.eq.s32.totalorder %s24, 0
      %p57 = por %p55, %p56
      %p58 = scmp.ne.s32.totalorder %s44, %s45
      %p59 = scmp.eq.s32.totalorder %s25, 1
      %p60 = por %p58, %p59
      %p62 = scmp.ne.s32.totalorder %s45, %s61
      %p63 = scmp.eq.s32.totalorder %s25, 0
      %p64 = por %p62, %p63
      %s65 = ssub.s32 %s27, %s34
      %p66 = scmp.eq.s32.totalorder %s65, 0
      %s68 = sadd.s32 %s67, 1
      %s69 = scalar_select %p66, %s67, %s68
      %p72 = pneg %p66
      %p73 = scmp.eq.s32.totalorder %s19, 1
      %p74 = por %p72, %p73
      %p75 = scmp.ne.s32.totalorder %s67, %s70
      %p76 = scmp.eq.s32.totalorder %s19, 0
      %p77 = por %p75, %p76
      %p78 = scmp.ne.s32.totalorder %s67, %s70
      %p79 = scmp.eq.s32.totalorder %s24, 1
      %p80 = por %p78, %p79
      %p81 = scmp.ne.s32.totalorder %s70, %s71
      %p82 = scmp.eq.s32.totalorder %s24, 0
      %p83 = por %p81, %p82
      %p84 = scmp.ne.s32.totalorder %s70, %s71
      %p85 = scmp.eq.s32.totalorder %s25, 1
      %p86 = por %p84, %p85
      %p88 = scmp.ne.s32.totalorder %s71, %s87
      %p89 = scmp.eq.s32.totalorder %s25, 0
      %p90 = por %p88, %p89
      %s91 = ssub.s32 %s27, %s34
      %p92 = scmp.eq.s32.totalorder %s91, 0
      %s94 = sadd.s32 %s93, 1
      %s95 = scalar_select %p92, %s93, %s94
      %p98 = pneg %p92
      %p99 = scmp.eq.s32.totalorder %s19, 1
      %p100 = por %p98, %p99
      %p101 = scmp.ne.s32.totalorder %s93, %s96
      %p102 = scmp.eq.s32.totalorder %s19, 0
      %p103 = por %p101, %p102
      %p104 = scmp.ne.s32.totalorder %s93, %s96
      %p105 = scmp.eq.s32.totalorder %s24, 1
      %p106 = por %p104, %p105
      %p107 = scmp.ne.s32.totalorder %s96, %s97
      %p108 = scmp.eq.s32.totalorder %s24, 0
      %p109 = por %p107, %p108
      %p110 = scmp.ne.s32.totalorder %s96, %s97
      %p111 = scmp.eq.s32.totalorder %s25, 1
      %p112 = por %p110, %p111
      %p114 = scmp.ne.s32.totalorder %s97, %s113
      %p115 = scmp.eq.s32.totalorder %s25, 0
      %p116 = por %p114, %p115
      %s117 = ssub.s32 %s27, %s34
      %p118 = scmp.eq.s32.totalorder %s117, 0
      %s120 = sadd.s32 %s119, 1
      %s121 = scalar_select %p118, %s119, %s120
      %p124 = pneg %p118
      %p125 = scmp.eq.s32.totalorder %s19, 1
      %p126 = por %p124, %p125
      %p127 = scmp.ne.s32.totalorder %s119, %s122
      %p128 = scmp.eq.s32.totalorder %s19, 0
      %p129 = por %p127, %p128
      %p130 = scmp.ne.s32.totalorder %s119, %s122
      %p131 = scmp.eq.s32.totalorder %s24, 1
      %p132 = por %p130, %p131
      %p133 = scmp.ne.s32.totalorder %s122, %s123
      %p134 = scmp.eq.s32.totalorder %s24, 0
      %p135 = por %p133, %p134
      %p136 = scmp.ne.s32.totalorder %s122, %s123
      %p137 = scmp.eq.s32.totalorder %s25, 1
      %p138 = por %p136, %p137
      %p140 = scmp.ne.s32.totalorder %s123, %s139
      %p141 = scmp.eq.s32.totalorder %s25, 0
      %p142 = por %p140, %p141
      %s143 = ssub.s32 %s27, %s34
      %p144 = scmp.eq.s32.totalorder %s143, 0
      %s146 = sadd.s32 %s145, 1
      %s147 = scalar_select %p144, %s145, %s146
      %p150 = pneg %p144
      %p151 = scmp.eq.s32.totalorder %s19, 1
      %p152 = por %p150, %p151
      %p153 = scmp.ne.s32.totalorder %s145, %s148
      %p154 = scmp.eq.s32.totalorder %s19, 0
      %p155 = por %p153, %p154
      %p156 = scmp.ne.s32.totalorder %s145, %s148
      %p157 = scmp.eq.s32.totalorder %s24, 1
      %p158 = por %p156, %p157
      %p159 = scmp.ne.s32.totalorder %s148, %s149
      %p160 = scmp.eq.s32.totalorder %s24, 0
      %p161 = por %p159, %p160
      %p162 = scmp.ne.s32.totalorder %s148, %s149
      %p163 = scmp.eq.s32.totalorder %s25, 1
      %p164 = por %p162, %p163
      %p166 = scmp.ne.s32.totalorder %s149, %s165
      %p167 = scmp.eq.s32.totalorder %s25, 0
      %p168 = por %p166, %p167
      %s169 = ssub.s32 %s27, %s34
      %p170 = scmp.eq.s32.totalorder %s169, 0
      %s172 = sadd.s32 %s171, 1
      %s173 = scalar_select %p170, %s171, %s172
      %p176 = pneg %p170
      %p177 = scmp.eq.s32.totalorder %s19, 1
      %p178 = por %p176, %p177
      %p179 = scmp.ne.s32.totalorder %s171, %s174
      %p180 = scmp.eq.s32.totalorder %s19, 0
      %p181 = por %p179, %p180
      %p182 = scmp.ne.s32.totalorder %s171, %s174
      %p183 = scmp.eq.s32.totalorder %s24, 1
      %p184 = por %p182, %p183
      %p185 = scmp.ne.s32.totalorder %s174, %s175
      %p186 = scmp.eq.s32.totalorder %s24, 0
      %p187 = por %p185, %p186
      %p188 = scmp.ne.s32.totalorder %s174, %s175
      %p189 = scmp.eq.s32.totalorder %s25, 1
      %p190 = por %p188, %p189
      %p192 = scmp.ne.s32.totalorder %s175, %s191
      %p193 = scmp.eq.s32.totalorder %s25, 0
      %p194 = por %p192, %p193
      %s196 = sadd.s32 %s195, 1
      %p199 = scmp.eq.s32.totalorder %s19, 1
      %p200 = scmp.ne.s32.totalorder %s195, %s197
      %p201 = scmp.eq.s32.totalorder %s19, 0
      %p202 = por %p200, %p201
      %p203 = scmp.ne.s32.totalorder %s195, %s197
      %p204 = scmp.eq.s32.totalorder %s24, 1
      %p205 = por %p203, %p204
      %p206 = scmp.ne.s32.totalorder %s197, %s198
      %p207 = scmp.eq.s32.totalorder %s24, 0
      %p208 = por %p206, %p207
      %p209 = scmp.ne.s32.totalorder %s197, %s198
      %p210 = scmp.eq.s32.totalorder %s25, 1
      %p211 = por %p209, %p210
      %p213 = scmp.ne.s32.totalorder %s198, %s212
      %p214 = scmp.eq.s32.totalorder %s25, 0
      %p215 = por %p213, %p214
      %s217 = sadd.s32 %s216, 1
      %p220 = scmp.eq.s32.totalorder %s19, 1
      %p221 = scmp.ne.s32.totalorder %s216, %s218
      %p222 = scmp.eq.s32.totalorder %s19, 0
      %p223 = por %p221, %p222
      %p224 = scmp.ne.s32.totalorder %s216, %s218
      %p225 = scmp.eq.s32.totalorder %s24, 1
      %p226 = por %p224, %p225
      %p227 = scmp.ne.s32.totalorder %s218, %s219
      %p228 = scmp.eq.s32.totalorder %s24, 0
      %p229 = por %p227, %p228
      %p230 = scmp.ne.s32.totalorder %s218, %s219
      %p231 = scmp.eq.s32.totalorder %s25, 1
      %p232 = por %p230, %p231
      %p234 = scmp.ne.s32.totalorder %s219, %s233
      %p235 = scmp.eq.s32.totalorder %s25, 0
      %p236 = por %p234, %p235
      %s237 = ssub.s32 %s26, %s38
      %p238 = scmp.eq.s32.totalorder %s237, 0
      %s240 = sadd.s32 %s239, 1
      %s241 = scalar_select %p238, %s239, %s240
      %p244 = pneg %p238
      %p245 = scmp.eq.s32.totalorder %s19, 1
      %p246 = por %p244, %p245
      %p247 = scmp.ne.s32.totalorder %s239, %s242
      %p248 = scmp.eq.s32.totalorder %s19, 0
      %p249 = por %p247, %p248
      %p250 = scmp.ne.s32.totalorder %s239, %s242
      %p251 = scmp.eq.s32.totalorder %s24, 1
      %p252 = por %p250, %p251
      %p253 = scmp.ne.s32.totalorder %s242, %s243
      %p254 = scmp.eq.s32.totalorder %s24, 0
      %p255 = por %p253, %p254
      %p256 = scmp.ne.s32.totalorder %s242, %s243
      %p257 = scmp.eq.s32.totalorder %s25, 1
      %p258 = por %p256, %p257
      %p260 = scmp.ne.s32.totalorder %s243, %s259
      %p261 = scmp.eq.s32.totalorder %s25, 0
      %p262 = por %p260, %p261
      %p263 = scmp.le.s32.totalorder 1, %s19
      %p264 = scmp.lt.s32.totalorder %s19, 3
      %p265 = pnand %p263, %p264
      %p266 = pneg %p265
      // Predicated region
      $region9: #{tpu_custom_call.1} parent=5 // pred_check
        _
      $region10: #{tpu_custom_call.1} parent=5 // pred_check_branch
        %268 = sbr.rel (%p265) target = $region12
      $region11: #{tpu_custom_call.1} parent=5 // pred_region
        %s269 = ssub.s32 %s19, 1
        // Predicated region
        $region13: #{tpu_custom_call.1} parent=11 // pred_check
          %p270 = pneg %p57
        $region14: #{tpu_custom_call.1} parent=11 // pred_check_branch
          %272 = sbr.rel (%p270) target = $region16
        $region15: #{tpu_custom_call.1} parent=11 // pred_region
          %s273 = smul.u32 2, %s28
          %s275 = ssub.s32 128, 128
          %276 = vsyncadd [#allocation4], %s275
          %s277 = smul.addr %s273, 64
          %s278 = scalar_lea.hbm %s0, %s277
          %s279 = sshll.u32 [#allocation3], 4
          %s280 = int_to_ptr.vmem [resolvable:$true] %s279
          %285 = dma.hbm_to_vmem [thread:$0]  %s278, 128, %s280, [#allocation4], 64, 64, 4
        $region16: #{tpu_custom_call.1} parent=11 // pred_fallthru
          _
        // Predicated region
        $region17: #{tpu_custom_call.1} parent=11 // pred_check
          %p286 = pneg %p208
        $region18: #{tpu_custom_call.1} parent=11 // pred_check_branch
          %288 = sbr.rel (%p286) target = $region20
        $region19: #{tpu_custom_call.1} parent=11 // pred_region
          _
        $region20: #{tpu_custom_call.1} parent=11 // pred_fallthru
          _
        // Predicated region
        $region21: #{tpu_custom_call.1} parent=11 // pred_check
          %p289 = pneg %p229
        $region22: #{tpu_custom_call.1} parent=11 // pred_check_branch
          %291 = sbr.rel (%p289) target = $region24
        $region23: #{tpu_custom_call.1} parent=11 // pred_region
          _
        $region24: #{tpu_custom_call.1} parent=11 // pred_fallthru
          _
      $region12: #{tpu_custom_call.1} parent=5 // pred_fallthru
        _
      %p292 = scmp.lt.s32.totalorder %s19, 2
      // Predicated region
      $region25: #{tpu_custom_call.1} parent=5 // pred_check
        %p293 = pneg %p292
      $region26: #{tpu_custom_call.1} parent=5 // pred_check_branch
        %295 = sbr.rel (%p293) target = $region28
      $region27: #{tpu_custom_call.1} parent=5 // pred_region
        // Predicated region
        $region29: #{tpu_custom_call.1} parent=27 // pred_check
          %p296 = pneg %p77
        $region30: #{tpu_custom_call.1} parent=27 // pred_check_branch
          %298 = sbr.rel (%p296) target = $region32
        $region31: #{tpu_custom_call.1} parent=27 // pred_region
          %p299 = scmp.lt.s32.totalorder %s27, 1
          %s300 = scalar_select %p299, %s27, 1
          %s301 = smul.addr %s300, 4
          %s302 = smul.addr %s301, 4
          %s303 = scalar_lea.vmem %s1, %s302
        $region32: #{tpu_custom_call.1} parent=27 // pred_fallthru
          _
        // Predicated region
        $region33: #{tpu_custom_call.1} parent=27 // pred_check
          %p304 = pneg %p103
        $region34: #{tpu_custom_call.1} parent=27 // pred_check_branch
          %306 = sbr.rel (%p304) target = $region36
        $region35: #{tpu_custom_call.1} parent=27 // pred_region
          %p307 = scmp.lt.s32.totalorder %s27, 1
          %s308 = scalar_select %p307, %s27, 1
          %s309 = smul.addr %s308, 4
          %s310 = smul.addr %s309, 4
          %s311 = scalar_lea.vmem %s2, %s310
        $region36: #{tpu_custom_call.1} parent=27 // pred_fallthru
          _
        // Predicated region
        $region37: #{tpu_custom_call.1} parent=27 // pred_check
          %p312 = pneg %p129
        $region38: #{tpu_custom_call.1} parent=27 // pred_check_branch
          %314 = sbr.rel (%p312) target = $region40
        $region39: #{tpu_custom_call.1} parent=27 // pred_region
          %p315 = scmp.lt.s32.totalorder %s27, 1
          %s316 = scalar_select %p315, %s27, 1
          %s317 = smul.addr %s316, 4
          %s318 = smul.addr %s317, 4
          %s319 = scalar_lea.vmem %s3, %s318
        $region40: #{tpu_custom_call.1} parent=27 // pred_fallthru
          _
        // Predicated region
        $region41: #{tpu_custom_call.1} parent=27 // pred_check
          %p320 = pneg %p155
        $region42: #{tpu_custom_call.1} parent=27 // pred_check_branch
          %322 = sbr.rel (%p320) target = $region44
        $region43: #{tpu_custom_call.1} parent=27 // pred_region
          %p323 = scmp.lt.s32.totalorder %s27, 1
          %s324 = scalar_select %p323, %s27, 1
          %s325 = smul.addr %s324, 8
          %s326 = smul.addr %s325, 4
          %s327 = scalar_lea.vmem %s4, %s326
        $region44: #{tpu_custom_call.1} parent=27 // pred_fallthru
          _
        // Predicated region
        $region45: #{tpu_custom_call.1} parent=27 // pred_check
          %p328 = pneg %p181
        $region46: #{tpu_custom_call.1} parent=27 // pred_check_branch
          %330 = sbr.rel (%p328) target = $region48
        $region47: #{tpu_custom_call.1} parent=27 // pred_region
          %s331 = sand.u32 %s171, 1
          %s332 = scalar_lea.sflag [#allocation7], %s331
          %s333 = sand.u32 %s171, 1
          %s334 = smul.addr %s333, 8
          %s335 = scalar_lea.vmem [#allocation6], %s334
          %s337 = ssub.s32 128, 128
          %338 = vsyncadd %s332, %s337
          %s339 = smul.addr %s27, 128
          %s340 = scalar_lea.hbm %s5, %s339
          %s342 = sshll.u32 %s335, 4
          %s343 = int_to_ptr.vmem [resolvable:$true] %s342
          %345 = dma.hbm_to_vmem [thread:$0]  %s340, 128, %s343, %s332
        $region48: #{tpu_custom_call.1} parent=27 // pred_fallthru
          _
      $region28: #{tpu_custom_call.1} parent=5 // pred_fallthru
        _
      %p346 = scmp.le.s32.totalorder 1, %s19
      %p347 = scmp.lt.s32.totalorder %s19, 3
      %p348 = pnand %p346, %p347
      %p349 = pneg %p348
      // Predicated region
      $region49: #{tpu_custom_call.1} parent=5 // pred_check
        _
      $region50: #{tpu_custom_call.1} parent=5 // pred_check_branch
        %351 = sbr.rel (%p348) target = $region52
      $region51: #{tpu_custom_call.1} parent=5 // pred_region
        %s352 = ssub.s32 %s19, 1
        // Predicated region
        $region53: #{tpu_custom_call.1} parent=51 // pred_check
          %p353 = pneg %p57
        $region54: #{tpu_custom_call.1} parent=51 // pred_check_branch
          %355 = sbr.rel (%p353) target = $region56
        $region55: #{tpu_custom_call.1} parent=51 // pred_region
          %356 = dma.done [#allocation4], 128
        $region56: #{tpu_custom_call.1} parent=51 // pred_fallthru
          _
        %s357 = sand.u32 %s174, 1
        %s358 = scalar_lea.sflag [#allocation7], %s357
        %s359 = sand.u32 %s174, 1
        %s360 = smul.addr %s359, 8
        %s361 = scalar_lea.vmem [#allocation6], %s360
        // Predicated region
        $region57: #{tpu_custom_call.1} parent=51 // pred_check
          %p362 = pneg %p187
        $region58: #{tpu_custom_call.1} parent=51 // pred_check_branch
          %364 = sbr.rel (%p362) target = $region60
        $region59: #{tpu_custom_call.1} parent=51 // pred_region
          %365 = dma.done %s358, 128
        $region60: #{tpu_custom_call.1} parent=51 // pred_fallthru
          _
        %p366 = pneg %p57
        %p367 = pneg %p54
        %p368 = scmp.lt.s32.totalorder %s29, 1
        %s369 = scalar_select %p368, %s29, 1
        %s370 = smul.addr %s369, 4
        %s371 = smul.addr %s370, 4
        %s372 = scalar_lea.vmem %s1, %s371
        %p373 = pneg %p83
        %p374 = pneg %p80
        %p375 = scmp.lt.s32.totalorder %s29, 1
        %s376 = scalar_select %p375, %s29, 1
        %s377 = smul.addr %s376, 4
        %s378 = smul.addr %s377, 4
        %s379 = scalar_lea.vmem %s2, %s378
        %p380 = pneg %p109
        %p381 = pneg %p106
        %p382 = scmp.lt.s32.totalorder %s29, 1
        %s383 = scalar_select %p382, %s29, 1
        %s384 = smul.addr %s383, 4
        %s385 = smul.addr %s384, 4
        %s386 = scalar_lea.vmem %s3, %s385
        %p387 = pneg %p135
        %p388 = pneg %p132
        %p389 = scmp.lt.s32.totalorder %s29, 1
        %s390 = scalar_select %p389, %s29, 1
        %s391 = smul.addr %s390, 8
        %s392 = smul.addr %s391, 4
        %s393 = scalar_lea.vmem %s4, %s392
        %p394 = pneg %p161
        %p395 = pneg %p158
        %s396 = sand.u32 %s174, 1
        %s397 = scalar_lea.sflag [#allocation7], %s396
        %s398 = sand.u32 %s174, 1
        %s399 = smul.addr %s398, 8
        %s400 = scalar_lea.vmem [#allocation6], %s399
        %p401 = pneg %p187
        %p402 = pneg %p184
        %p403 = pneg %p208
        %p404 = pneg %p205
        %p405 = pneg %p229
        %p406 = pneg %p226
        %p407 = pneg %p255
        %p408 = pneg %p252
        %s409 = smul.u32 2, %s28
        %p410 = scmp.lt.s32.totalorder %s29, 1
        %s411 = scalar_select %p410, %s29, 1
        %s412 = smul.addr %s411, 4
        %s413 = smul.addr %s412, 4
        %s414 = scalar_lea.vmem %s1, %s413
        %p415 = scmp.lt.s32.totalorder %s29, 1
        %s416 = scalar_select %p415, %s29, 1
        %s417 = smul.addr %s416, 4
        %s418 = smul.addr %s417, 4
        %s419 = scalar_lea.vmem %s2, %s418
        %p420 = scmp.lt.s32.totalorder %s29, 1
        %s421 = scalar_select %p420, %s29, 1
        %s422 = smul.addr %s421, 4
        %s423 = smul.addr %s422, 4
        %s424 = scalar_lea.vmem %s3, %s423
        %p425 = scmp.lt.s32.totalorder %s29, 1
        %s426 = scalar_select %p425, %s29, 1
        %s427 = smul.addr %s426, 8
        %s428 = smul.addr %s427, 4
        %s429 = scalar_lea.vmem %s4, %s428
        %s430 = smul.u32 2, %s28
        %p432 = scmp.eq.s32.totalorder %s29, 0
        // Predicated region
        $region61: #{tpu_custom_call.1} parent=51 // pred_check
          %p433 = pneg %p432
        $region62: #{tpu_custom_call.1} parent=51 // pred_check_branch
          %435 = sbr.rel (%p433) target = $region64
        $region63: #{tpu_custom_call.1} parent=51 // pred_region
          %v436 = vld [vmem:[#allocation3] sm:$0xf]
          %v437 = vld [vmem:[#allocation3 + $0x4] sm:$0xf]
          %v438 = vunpack.c.l.bf16 %v436
          %v439 = vunpack.c.l.bf16 %v437
          %vm440 = vcmask 261120
          %441 = vst.msk [vmem:[#allocation2] sm:$0xff] %vm440, %v438
          %442 = vst.msk [vmem:[#allocation2 + $0x8] sm:$0xff] %vm440, %v439
        $region64: #{tpu_custom_call.1} parent=51 // pred_fallthru
          _
        %v443 = vld [vmem:[#allocation2] sm:$0xff]
        %v444 = vld [vmem:[#allocation2 + $0x8] sm:$0xff]
        %v445 = vpack.c.bf16 %v444, %v443
        %v446 = vld [vmem:[%s361] sm:$0xff]
        %v447 = vld [vmem:[%s414] sm:$0xf]
        %v448 = vld [vmem:[%s414 + $0x4] sm:$0xf]
        %v449 = vld [vmem:[%s414 + $0x8] sm:$0xf]
        %v450 = vld [vmem:[%s414 + $0xc] sm:$0xf]
        %v451 = vlaneseq
        %v452 = vshrl.u32 %v451, 7
        %v453 = vsub.s32 0, %v452
        %v454 = vrot.slane %v446, %v453
        %v459 = vunpack.c.l.b16 %v447
        %v460 = vunpack.c.l.b16 %v448
        %v461 = vunpack.c.l.b16 %v449
        %v462 = vunpack.c.l.b16 %v450
        %v463 = vpack.c.b16 %v460, %v459
        %v464 = vpack.c.b16 %v462, %v461
        %vm467 = vcmask 261120
        %v469 = vsel %vm467, %v445, 0
        %471 = vmatprep.subr.bf16.mxu0 0
        %472 = vmatpush1.bf16.msra.mxu0 0
        %473 = vmatprep.subr.bf16.mxu0 0
        %474 = vmatpush1.bf16.msra.mxu0 0
        %475 = vmatprep.subr.bf16.mxu0 0
        %476 = vmatpush1.bf16.msra.mxu0 0
        %477 = vmatprep.subr.bf16.mxu0 0
        %478 = vmatpush1.bf16.msra.mxu0 0
        %479 = vmatprep.subr.bf16.mxu0 0
        %480 = vmatpush1.bf16.msra.mxu0 0
        %481 = vmatprep.subr.bf16.mxu0 0
        %482 = vmatpush1.bf16.msra.mxu0 0
        %483 = vmatprep.subr.bf16.mxu0 0
        %484 = vmatpush1.bf16.msra.mxu0 %v464
        %485 = vmatprep.subr.bf16.mxu0 0
        %486 = vmatpush1.bf16.msra.mxu0 %v463
        %487 = vmatprep.subr.bf16.mxu0 0
        %488 = vmatpush2.bf16.msra.mxu0 0
        %489 = vmatprep.subr.bf16.mxu0 0
        %490 = vmatpush2.bf16.msra.mxu0 0
        %491 = vmatprep.subr.bf16.mxu0 0
        %492 = vmatpush2.bf16.msra.mxu0 0
        %493 = vmatprep.subr.bf16.mxu0 0
        %494 = vmatpush2.bf16.msra.mxu0 0
        %495 = vmatprep.subr.bf16.mxu0 0
        %496 = vmatpush2.bf16.msra.mxu0 0
        %497 = vmatprep.subr.bf16.mxu0 0
        %498 = vmatpush2.bf16.msra.mxu0 0
        %499 = vmatprep.subr.bf16.mxu0 0
        %500 = vmatpush2.bf16.msra.mxu0 0
        %501 = vmatprep.subr.bf16.mxu0 0
        %502 = vmatpush2.bf16.msra.mxu0 0
        %503 = vmatprep.mubr.bf16.mxu0 0
        %504 = vmatmul.mubr.bf16.gmra.mxu0 %v469
        %v505 = vpop.f32.mrf.mxu0
        %v506 = vadd.f32 %v454, %v505
        %v507 = vpop.f32.mrf.mxu0
        %v508 = vpop.f32.mrf.mxu0
        %v509 = vadd.f32 %v454, %v508
        %v510 = vpop.f32.mrf.mxu0
        %511 = vdwg.mxu0
        %v512 = vpack.c.bf16 %v506, %v506
        %v513 = vpack.c.bf16 %v509, %v509
        %515 = vrot.lane.b32.xlu0 %v512, 96
        %v516 = vpop.permute.xlu0 %515
        %vm517 = vcmask 64512
        %v519 = vsel %vm517, %v512, 0
        %v522 = vsel %vm517, %v516, 0
        %524 = vmatprep.subr.bf16.mxu0 0
        %525 = vmatpush1.bf16.xpose.msra.mxu0 0
        %526 = vmatprep.subr.bf16.mxu0 0
        %527 = vmatpush1.bf16.xpose.msra.mxu0 0
        %528 = vmatprep.subr.bf16.mxu0 0
        %529 = vmatpush1.bf16.xpose.msra.mxu0 0
        %530 = vmatprep.subr.bf16.mxu0 0
        %531 = vmatpush1.bf16.xpose.msra.mxu0 0
        %532 = vmatprep.subr.bf16.mxu0 0
        %533 = vmatpush1.bf16.xpose.msra.mxu0 0
        %534 = vmatprep.subr.bf16.mxu0 0
        %535 = vmatpush1.bf16.xpose.msra.mxu0 0
        %536 = vmatprep.subr.bf16.mxu0 0
        %537 = vmatpush1.bf16.xpose.msra.mxu0 0
        %538 = vmatprep.subr.bf16.mxu0 0
        %539 = vmatpush1.bf16.xpose.msra.mxu0 %v522
        %540 = vmatprep.subr.bf16.mxu0 0
        %541 = vmatpush2.bf16.xpose.msra.mxu0 0
        %542 = vmatprep.subr.bf16.mxu0 0
        %543 = vmatpush2.bf16.xpose.msra.mxu0 0
        %544 = vmatprep.subr.bf16.mxu0 0
        %545 = vmatpush2.bf16.xpose.msra.mxu0 0
        %546 = vmatprep.subr.bf16.mxu0 0
        %547 = vmatpush2.bf16.xpose.msra.mxu0 0
        %548 = vmatprep.subr.bf16.mxu0 0
        %549 = vmatpush2.bf16.xpose.msra.mxu0 0
        %550 = vmatprep.subr.bf16.mxu0 0
        %551 = vmatpush2.bf16.xpose.msra.mxu0 0
        %552 = vmatprep.subr.bf16.mxu0 0
        %553 = vmatpush2.bf16.xpose.msra.mxu0 0
        %554 = vmatprep.subr.bf16.mxu0 0
        %555 = vmatpush2.bf16.xpose.msra.mxu0 0
        %556 = vmatprep.mubr.bf16.mxu0 0
        %557 = vmatmul.mubr.bf16.gmra.mxu0 %v519
        %v558 = vpop.f32.mrf.mxu0
        %v559 = vadd.f32 0.0, %v558
        %v560 = vpop.f32.mrf.mxu0
        %v561 = vpop.f32.mrf.mxu0
        %v562 = vpop.f32.mrf.mxu0
        %563 = vdwg.mxu0
        %565 = vrot.lane.b32.xlu0 %v513, 96
        %v566 = vpop.permute.xlu0 %565
        %v568 = vsel %vm517, %v513, 0
        %v571 = vsel %vm517, %v566, 0
        %573 = vmatprep.subr.bf16.mxu0 0
        %574 = vmatpush1.bf16.xpose.msra.mxu0 0
        %575 = vmatprep.subr.bf16.mxu0 0
        %576 = vmatpush1.bf16.xpose.msra.mxu0 0
        %577 = vmatprep.subr.bf16.mxu0 0
        %578 = vmatpush1.bf16.xpose.msra.mxu0 0
        %579 = vmatprep.subr.bf16.mxu0 0
        %580 = vmatpush1.bf16.xpose.msra.mxu0 0
        %581 = vmatprep.subr.bf16.mxu0 0
        %582 = vmatpush1.bf16.xpose.msra.mxu0 0
        %583 = vmatprep.subr.bf16.mxu0 0
        %584 = vmatpush1.bf16.xpose.msra.mxu0 0
        %585 = vmatprep.subr.bf16.mxu0 0
        %586 = vmatpush1.bf16.xpose.msra.mxu0 0
        %587 = vmatprep.subr.bf16.mxu0 0
        %588 = vmatpush1.bf16.xpose.msra.mxu0 %v571
        %589 = vmatprep.subr.bf16.mxu0 0
        %590 = vmatpush2.bf16.xpose.msra.mxu0 0
        %591 = vmatprep.subr.bf16.mxu0 0
        %592 = vmatpush2.bf16.xpose.msra.mxu0 0
        %593 = vmatprep.subr.bf16.mxu0 0
        %594 = vmatpush2.bf16.xpose.msra.mxu0 0
        %595 = vmatprep.subr.bf16.mxu0 0
        %596 = vmatpush2.bf16.xpose.msra.mxu0 0
        %597 = vmatprep.subr.bf16.mxu0 0
        %598 = vmatpush2.bf16.xpose.msra.mxu0 0
        %599 = vmatprep.subr.bf16.mxu0 0
        %600 = vmatpush2.bf16.xpose.msra.mxu0 0
        %601 = vmatprep.subr.bf16.mxu0 0
        %602 = vmatpush2.bf16.xpose.msra.mxu0 0
        %603 = vmatprep.subr.bf16.mxu0 0
        %604 = vmatpush2.bf16.xpose.msra.mxu0 0
        %605 = vmatprep.mubr.bf16.mxu0 0
        %606 = vmatmul.mubr.bf16.gmra.mxu0 %v568
        %v607 = vpop.f32.mrf.mxu0
        %v608 = vadd.f32 0.0, %v607
        %v609 = vpop.f32.mrf.mxu0
        %v610 = vpop.f32.mrf.mxu0
        %v611 = vpop.f32.mrf.mxu0
        %612 = vdwg.mxu0
        %v613 = vsel %vm517, %v559, -inf
        %614 = vmax.xlane.f32.xlu0 %v613
        %v615 = vpop.xlane.xlu0 %614
        %v616 = vsel %vm517, %v608, -inf
        %617 = vmax.xlane.f32.xlu0 %v616
        %v618 = vpop.xlane.xlu0 %617
        %v619 = vsub.f32 %v559, %v615
        %v620 = vsub.f32 %v608, %v618
        %v621 = vmul.f32 %v619, 1.442695
        %v622 = vpow.pop %v621
        %v623 = vmul.f32 %v620, 1.442695
        %v624 = vpow.pop %v623
        %v625 = vsel %vm517, %v622, 0.0
        %626 = vadd.xlane.f32.xlu0 %v625
        %v627 = vpop.xlane.xlu0 %626
        %v628 = vsel %vm517, %v624, 0.0
        %629 = vadd.xlane.f32.xlu0 %v628
        %v630 = vpop.xlane.xlu0 %629
        %v631 = vrcp.pop %v627
        %v632 = vrcp.pop %v630
        %v633 = vmul.f32 %v622, %v631
        %v634 = vmul.f32 %v624, %v632
        %v635 = vpack.c.bf16 %v633, %v633
        %v636 = vpack.c.bf16 %v634, %v634
        %637 = vrot.lane.b32.xlu0 %v512, 64
        %v638 = vpop.permute.xlu0 %637
        %v640 = vsel %vm517, %v635, 0
        %vm642 = vcmask 1043456
        %v644 = vsel %vm642, %v638, 0
        %646 = vmatprep.subr.bf16.mxu0 0
        %647 = vmatpush1.bf16.msra.mxu0 0
        %648 = vmatprep.subr.bf16.mxu0 0
        %649 = vmatpush1.bf16.msra.mxu0 0
        %650 = vmatprep.subr.bf16.mxu0 0
        %651 = vmatpush1.bf16.msra.mxu0 0
        %652 = vmatprep.subr.bf16.mxu0 0
        %653 = vmatpush1.bf16.msra.mxu0 0
        %654 = vmatprep.subr.bf16.mxu0 0
        %655 = vmatpush1.bf16.msra.mxu0 0
        %656 = vmatprep.subr.bf16.mxu0 0
        %657 = vmatpush1.bf16.msra.mxu0 0
        %658 = vmatprep.subr.bf16.mxu0 0
        %659 = vmatpush1.bf16.msra.mxu0 0
        %660 = vmatprep.subr.bf16.mxu0 0
        %661 = vmatpush1.bf16.msra.mxu0 %v644
        %662 = vmatprep.subr.bf16.mxu0 0
        %663 = vmatpush2.bf16.msra.mxu0 0
        %664 = vmatprep.subr.bf16.mxu0 0
        %665 = vmatpush2.bf16.msra.mxu0 0
        %666 = vmatprep.subr.bf16.mxu0 0
        %667 = vmatpush2.bf16.msra.mxu0 0
        %668 = vmatprep.subr.bf16.mxu0 0
        %669 = vmatpush2.bf16.msra.mxu0 0
        %670 = vmatprep.subr.bf16.mxu0 0
        %671 = vmatpush2.bf16.msra.mxu0 0
        %672 = vmatprep.subr.bf16.mxu0 0
        %673 = vmatpush2.bf16.msra.mxu0 0
        %674 = vmatprep.subr.bf16.mxu0 0
        %675 = vmatpush2.bf16.msra.mxu0 0
        %676 = vmatprep.subr.bf16.mxu0 0
        %677 = vmatpush2.bf16.msra.mxu0 0
        %678 = vmatprep.mubr.bf16.mxu0 0
        %679 = vmatmul.mubr.bf16.gmra.mxu0 %v640
        %v680 = vpop.f32.mrf.mxu0
        %v681 = vadd.f32 0.0, %v680
        %v682 = vpop.f32.mrf.mxu0
        %v683 = vpop.f32.mrf.mxu0
        %v684 = vpop.f32.mrf.mxu0
        %685 = vdwg.mxu0
        %686 = vrot.lane.b32.xlu0 %v513, 64
        %v687 = vpop.permute.xlu0 %686
        %v689 = vsel %vm517, %v636, 0
        %v692 = vsel %vm642, %v687, 0
        %694 = vmatprep.subr.bf16.mxu0 0
        %695 = vmatpush1.bf16.msra.mxu0 0
        %696 = vmatprep.subr.bf16.mxu0 0
        %697 = vmatpush1.bf16.msra.mxu0 0
        %698 = vmatprep.subr.bf16.mxu0 0
        %699 = vmatpush1.bf16.msra.mxu0 0
        %700 = vmatprep.subr.bf16.mxu0 0
        %701 = vmatpush1.bf16.msra.mxu0 0
        %702 = vmatprep.subr.bf16.mxu0 0
        %703 = vmatpush1.bf16.msra.mxu0 0
        %704 = vmatprep.subr.bf16.mxu0 0
        %705 = vmatpush1.bf16.msra.mxu0 0
        %706 = vmatprep.subr.bf16.mxu0 0
        %707 = vmatpush1.bf16.msra.mxu0 0
        %708 = vmatprep.subr.bf16.mxu0 0
        %709 = vmatpush1.bf16.msra.mxu0 %v692
        %710 = vmatprep.subr.bf16.mxu0 0
        %711 = vmatpush2.bf16.msra.mxu0 0
        %712 = vmatprep.subr.bf16.mxu0 0
        %713 = vmatpush2.bf16.msra.mxu0 0
        %714 = vmatprep.subr.bf16.mxu0 0
        %715 = vmatpush2.bf16.msra.mxu0 0
        %716 = vmatprep.subr.bf16.mxu0 0
        %717 = vmatpush2.bf16.msra.mxu0 0
        %718 = vmatprep.subr.bf16.mxu0 0
        %719 = vmatpush2.bf16.msra.mxu0 0
        %720 = vmatprep.subr.bf16.mxu0 0
        %721 = vmatpush2.bf16.msra.mxu0 0
        %722 = vmatprep.subr.bf16.mxu0 0
        %723 = vmatpush2.bf16.msra.mxu0 0
        %724 = vmatprep.subr.bf16.mxu0 0
        %725 = vmatpush2.bf16.msra.mxu0 0
        %726 = vmatprep.mubr.bf16.mxu0 0
        %727 = vmatmul.mubr.bf16.gmra.mxu0 %v689
        %v728 = vpop.f32.mrf.mxu0
        %v729 = vadd.f32 0.0, %v728
        %v730 = vpop.f32.mrf.mxu0
        %v731 = vpop.f32.mrf.mxu0
        %v732 = vpop.f32.mrf.mxu0
        %733 = vdwg.mxu0
        %734 = vrot.lane.b32.xlu0 %v512, 120
        %v735 = vpop.permute.xlu0 %734
        %736 = vrot.lane.b32.xlu0 %v512, 88
        %v737 = vpop.permute.xlu0 %736
        %v739 = vsel %vm517, %v735, 0
        %v742 = vsel %vm517, %v737, 0
        %744 = vmatprep.subr.bf16.mxu0 0
        %745 = vmatpush1.bf16.xpose.msra.mxu0 0
        %746 = vmatprep.subr.bf16.mxu0 0
        %747 = vmatpush1.bf16.xpose.msra.mxu0 0
        %748 = vmatprep.subr.bf16.mxu0 0
        %749 = vmatpush1.bf16.xpose.msra.mxu0 0
        %750 = vmatprep.subr.bf16.mxu0 0
        %751 = vmatpush1.bf16.xpose.msra.mxu0 0
        %752 = vmatprep.subr.bf16.mxu0 0
        %753 = vmatpush1.bf16.xpose.msra.mxu0 0
        %754 = vmatprep.subr.bf16.mxu0 0
        %755 = vmatpush1.bf16.xpose.msra.mxu0 0
        %756 = vmatprep.subr.bf16.mxu0 0
        %757 = vmatpush1.bf16.xpose.msra.mxu0 0
        %758 = vmatprep.subr.bf16.mxu0 0
        %759 = vmatpush1.bf16.xpose.msra.mxu0 %v742
        %760 = vmatprep.subr.bf16.mxu0 0
        %761 = vmatpush2.bf16.xpose.msra.mxu0 0
        %762 = vmatprep.subr.bf16.mxu0 0
        %763 = vmatpush2.bf16.xpose.msra.mxu0 0
        %764 = vmatprep.subr.bf16.mxu0 0
        %765 = vmatpush2.bf16.xpose.msra.mxu0 0
        %766 = vmatprep.subr.bf16.mxu0 0
        %767 = vmatpush2.bf16.xpose.msra.mxu0 0
        %768 = vmatprep.subr.bf16.mxu0 0
        %769 = vmatpush2.bf16.xpose.msra.mxu0 0
        %770 = vmatprep.subr.bf16.mxu0 0
        %771 = vmatpush2.bf16.xpose.msra.mxu0 0
        %772 = vmatprep.subr.bf16.mxu0 0
        %773 = vmatpush2.bf16.xpose.msra.mxu0 0
        %774 = vmatprep.subr.bf16.mxu0 0
        %775 = vmatpush2.bf16.xpose.msra.mxu0 0
        %776 = vmatprep.mubr.bf16.mxu0 0
        %777 = vmatmul.mubr.bf16.gmra.mxu0 %v739
        %v778 = vpop.f32.mrf.mxu0
        %v779 = vadd.f32 0.0, %v778
        %v780 = vpop.f32.mrf.mxu0
        %v781 = vpop.f32.mrf.mxu0
        %v782 = vpop.f32.mrf.mxu0
        %783 = vdwg.mxu0
        %784 = vrot.lane.b32.xlu0 %v513, 120
        %v785 = vpop.permute.xlu0 %784
        %786 = vrot.lane.b32.xlu0 %v513, 88
        %v787 = vpop.permute.xlu0 %786
        %v789 = vsel %vm517, %v785, 0
        %v792 = vsel %vm517, %v787, 0
        %794 = vmatprep.subr.bf16.mxu0 0
        %795 = vmatpush1.bf16.xpose.msra.mxu0 0
        %796 = vmatprep.subr.bf16.mxu0 0
        %797 = vmatpush1.bf16.xpose.msra.mxu0 0
        %798 = vmatprep.subr.bf16.mxu0 0
        %799 = vmatpush1.bf16.xpose.msra.mxu0 0
        %800 = vmatprep.subr.bf16.mxu0 0
        %801 = vmatpush1.bf16.xpose.msra.mxu0 0
        %802 = vmatprep.subr.bf16.mxu0 0
        %803 = vmatpush1.bf16.xpose.msra.mxu0 0
        %804 = vmatprep.subr.bf16.mxu0 0
        %805 = vmatpush1.bf16.xpose.msra.mxu0 0
        %806 = vmatprep.subr.bf16.mxu0 0
        %807 = vmatpush1.bf16.xpose.msra.mxu0 0
        %808 = vmatprep.subr.bf16.mxu0 0
        %809 = vmatpush1.bf16.xpose.msra.mxu0 %v792
        %810 = vmatprep.subr.bf16.mxu0 0
        %811 = vmatpush2.bf16.xpose.msra.mxu0 0
        %812 = vmatprep.subr.bf16.mxu0 0
        %813 = vmatpush2.bf16.xpose.msra.mxu0 0
        %814 = vmatprep.subr.bf16.mxu0 0
        %815 = vmatpush2.bf16.xpose.msra.mxu0 0
        %816 = vmatprep.subr.bf16.mxu0 0
        %817 = vmatpush2.bf16.xpose.msra.mxu0 0
        %818 = vmatprep.subr.bf16.mxu0 0
        %819 = vmatpush2.bf16.xpose.msra.mxu0 0
        %820 = vmatprep.subr.bf16.mxu0 0
        %821 = vmatpush2.bf16.xpose.msra.mxu0 0
        %822 = vmatprep.subr.bf16.mxu0 0
        %823 = vmatpush2.bf16.xpose.msra.mxu0 0
        %824 = vmatprep.subr.bf16.mxu0 0
        %825 = vmatpush2.bf16.xpose.msra.mxu0 0
        %826 = vmatprep.mubr.bf16.mxu0 0
        %827 = vmatmul.mubr.bf16.gmra.mxu0 %v789
        %v828 = vpop.f32.mrf.mxu0
        %v829 = vadd.f32 0.0, %v828
        %v830 = vpop.f32.mrf.mxu0
        %v831 = vpop.f32.mrf.mxu0
        %v832 = vpop.f32.mrf.mxu0
        %833 = vdwg.mxu0
        %v834 = vsel %vm517, %v779, -inf
        %835 = vmax.xlane.f32.xlu0 %v834
        %v836 = vpop.xlane.xlu0 %835
        %v837 = vsel %vm517, %v829, -inf
        %838 = vmax.xlane.f32.xlu0 %v837
        %v839 = vpop.xlane.xlu0 %838
        %v840 = vsub.f32 %v779, %v836
        %v841 = vsub.f32 %v829, %v839
        %v842 = vmul.f32 %v840, 1.442695
        %v843 = vpow.pop %v842
        %v844 = vmul.f32 %v841, 1.442695
        %v845 = vpow.pop %v844
        %v846 = vsel %vm517, %v843, 0.0
        %847 = vadd.xlane.f32.xlu0 %v846
        %v848 = vpop.xlane.xlu0 %847
        %v849 = vsel %vm517, %v845, 0.0
        %850 = vadd.xlane.f32.xlu0 %v849
        %v851 = vpop.xlane.xlu0 %850
        %v852 = vrcp.pop %v848
        %v853 = vrcp.pop %v851
        %v854 = vmul.f32 %v843, %v852
        %v855 = vmul.f32 %v845, %v853
        %v856 = vpack.c.bf16 %v854, %v854
        %v857 = vpack.c.bf16 %v855, %v855
        %858 = vrot.lane.b32.xlu0 %v512, 56
        %v859 = vpop.permute.xlu0 %858
        %v861 = vsel %vm517, %v856, 0
        %v864 = vsel %vm642, %v859, 0
        %866 = vmatprep.subr.bf16.mxu0 0
        %867 = vmatpush1.bf16.msra.mxu0 0
        %868 = vmatprep.subr.bf16.mxu0 0
        %869 = vmatpush1.bf16.msra.mxu0 0
        %870 = vmatprep.subr.bf16.mxu0 0
        %871 = vmatpush1.bf16.msra.mxu0 0
        %872 = vmatprep.subr.bf16.mxu0 0
        %873 = vmatpush1.bf16.msra.mxu0 0
        %874 = vmatprep.subr.bf16.mxu0 0
        %875 = vmatpush1.bf16.msra.mxu0 0
        %876 = vmatprep.subr.bf16.mxu0 0
        %877 = vmatpush1.bf16.msra.mxu0 0
        %878 = vmatprep.subr.bf16.mxu0 0
        %879 = vmatpush1.bf16.msra.mxu0 0
        %880 = vmatprep.subr.bf16.mxu0 0
        %881 = vmatpush1.bf16.msra.mxu0 %v864
        %882 = vmatprep.subr.bf16.mxu0 0
        %883 = vmatpush2.bf16.msra.mxu0 0
        %884 = vmatprep.subr.bf16.mxu0 0
        %885 = vmatpush2.bf16.msra.mxu0 0
        %886 = vmatprep.subr.bf16.mxu0 0
        %887 = vmatpush2.bf16.msra.mxu0 0
        %888 = vmatprep.subr.bf16.mxu0 0
        %889 = vmatpush2.bf16.msra.mxu0 0
        %890 = vmatprep.subr.bf16.mxu0 0
        %891 = vmatpush2.bf16.msra.mxu0 0
        %892 = vmatprep.subr.bf16.mxu0 0
        %893 = vmatpush2.bf16.msra.mxu0 0
        %894 = vmatprep.subr.bf16.mxu0 0
        %895 = vmatpush2.bf16.msra.mxu0 0
        %896 = vmatprep.subr.bf16.mxu0 0
        %897 = vmatpush2.bf16.msra.mxu0 0
        %898 = vmatprep.mubr.bf16.mxu0 0
        %899 = vmatmul.mubr.bf16.gmra.mxu0 %v861
        %v900 = vpop.f32.mrf.mxu0
        %v901 = vadd.f32 0.0, %v900
        %v902 = vpop.f32.mrf.mxu0
        %v903 = vpop.f32.mrf.mxu0
        %v904 = vpop.f32.mrf.mxu0
        %905 = vdwg.mxu0
        %906 = vrot.lane.b32.xlu0 %v513, 56
        %v907 = vpop.permute.xlu0 %906
        %v909 = vsel %vm517, %v857, 0
        %v912 = vsel %vm642, %v907, 0
        %914 = vmatprep.subr.bf16.mxu0 0
        %915 = vmatpush1.bf16.msra.mxu0 0
        %916 = vmatprep.subr.bf16.mxu0 0
        %917 = vmatpush1.bf16.msra.mxu0 0
        %918 = vmatprep.subr.bf16.mxu0 0
        %919 = vmatpush1.bf16.msra.mxu0 0
        %920 = vmatprep.subr.bf16.mxu0 0
        %921 = vmatpush1.bf16.msra.mxu0 0
        %922 = vmatprep.subr.bf16.mxu0 0
        %923 = vmatpush1.bf16.msra.mxu0 0
        %924 = vmatprep.subr.bf16.mxu0 0
        %925 = vmatpush1.bf16.msra.mxu0 0
        %926 = vmatprep.subr.bf16.mxu0 0
        %927 = vmatpush1.bf16.msra.mxu0 0
        %928 = vmatprep.subr.bf16.mxu0 0
        %929 = vmatpush1.bf16.msra.mxu0 %v912
        %930 = vmatprep.subr.bf16.mxu0 0
        %931 = vmatpush2.bf16.msra.mxu0 0
        %932 = vmatprep.subr.bf16.mxu0 0
        %933 = vmatpush2.bf16.msra.mxu0 0
        %934 = vmatprep.subr.bf16.mxu0 0
        %935 = vmatpush2.bf16.msra.mxu0 0
        %936 = vmatprep.subr.bf16.mxu0 0
        %937 = vmatpush2.bf16.msra.mxu0 0
        %938 = vmatprep.subr.bf16.mxu0 0
        %939 = vmatpush2.bf16.msra.mxu0 0
        %940 = vmatprep.subr.bf16.mxu0 0
        %941 = vmatpush2.bf16.msra.mxu0 0
        %942 = vmatprep.subr.bf16.mxu0 0
        %943 = vmatpush2.bf16.msra.mxu0 0
        %944 = vmatprep.subr.bf16.mxu0 0
        %945 = vmatpush2.bf16.msra.mxu0 0
        %946 = vmatprep.mubr.bf16.mxu0 0
        %947 = vmatmul.mubr.bf16.gmra.mxu0 %v909
        %v948 = vpop.f32.mrf.mxu0
        %v949 = vadd.f32 0.0, %v948
        %v950 = vpop.f32.mrf.mxu0
        %v951 = vpop.f32.mrf.mxu0
        %v952 = vpop.f32.mrf.mxu0
        %953 = vdwg.mxu0
        %954 = vrot.lane.b32.xlu0 %v512, 112
        %v955 = vpop.permute.xlu0 %954
        %956 = vrot.lane.b32.xlu0 %v512, 80
        %v957 = vpop.permute.xlu0 %956
        %v959 = vsel %vm517, %v955, 0
        %v962 = vsel %vm517, %v957, 0
        %964 = vmatprep.subr.bf16.mxu0 0
        %965 = vmatpush1.bf16.xpose.msra.mxu0 0
        %966 = vmatprep.subr.bf16.mxu0 0
        %967 = vmatpush1.bf16.xpose.msra.mxu0 0
        %968 = vmatprep.subr.bf16.mxu0 0
        %969 = vmatpush1.bf16.xpose.msra.mxu0 0
        %970 = vmatprep.subr.bf16.mxu0 0
        %971 = vmatpush1.bf16.xpose.msra.mxu0 0
        %972 = vmatprep.subr.bf16.mxu0 0
        %973 = vmatpush1.bf16.xpose.msra.mxu0 0
        %974 = vmatprep.subr.bf16.mxu0 0
        %975 = vmatpush1.bf16.xpose.msra.mxu0 0
        %976 = vmatprep.subr.bf16.mxu0 0
        %977 = vmatpush1.bf16.xpose.msra.mxu0 0
        %978 = vmatprep.subr.bf16.mxu0 0
        %979 = vmatpush1.bf16.xpose.msra.mxu0 %v962
        %980 = vmatprep.subr.bf16.mxu0 0
        %981 = vmatpush2.bf16.xpose.msra.mxu0 0
        %982 = vmatprep.subr.bf16.mxu0 0
        %983 = vmatpush2.bf16.xpose.msra.mxu0 0
        %984 = vmatprep.subr.bf16.mxu0 0
        %985 = vmatpush2.bf16.xpose.msra.mxu0 0
        %986 = vmatprep.subr.bf16.mxu0 0
        %987 = vmatpush2.bf16.xpose.msra.mxu0 0
        %988 = vmatprep.subr.bf16.mxu0 0
        %989 = vmatpush2.bf16.xpose.msra.mxu0 0
        %990 = vmatprep.subr.bf16.mxu0 0
        %991 = vmatpush2.bf16.xpose.msra.mxu0 0
        %992 = vmatprep.subr.bf16.mxu0 0
        %993 = vmatpush2.bf16.xpose.msra.mxu0 0
        %994 = vmatprep.subr.bf16.mxu0 0
        %995 = vmatpush2.bf16.xpose.msra.mxu0 0
        %996 = vmatprep.mubr.bf16.mxu0 0
        %997 = vmatmul.mubr.bf16.gmra.mxu0 %v959
        %v998 = vpop.f32.mrf.mxu0
        %v999 = vadd.f32 0.0, %v998
        %v1000 = vpop.f32.mrf.mxu0
        %v1001 = vpop.f32.mrf.mxu0
        %v1002 = vpop.f32.mrf.mxu0
        %1003 = vdwg.mxu0
        %1004 = vrot.lane.b32.xlu0 %v513, 112
        %v1005 = vpop.permute.xlu0 %1004
        %1006 = vrot.lane.b32.xlu0 %v513, 80
        %v1007 = vpop.permute.xlu0 %1006
        %v1009 = vsel %vm517, %v1005, 0
        %v1012 = vsel %vm517, %v1007, 0
        %1014 = vmatprep.subr.bf16.mxu0 0
        %1015 = vmatpush1.bf16.xpose.msra.mxu0 0
        %1016 = vmatprep.subr.bf16.mxu0 0
        %1017 = vmatpush1.bf16.xpose.msra.mxu0 0
        %1018 = vmatprep.subr.bf16.mxu0 0
        %1019 = vmatpush1.bf16.xpose.msra.mxu0 0
        %1020 = vmatprep.subr.bf16.mxu0 0
        %1021 = vmatpush1.bf16.xpose.msra.mxu0 0
        %1022 = vmatprep.subr.bf16.mxu0 0
        %1023 = vmatpush1.bf16.xpose.msra.mxu0 0
        %1024 = vmatprep.subr.bf16.mxu0 0
        %1025 = vmatpush1.bf16.xpose.msra.mxu0 0
        %1026 = vmatprep.subr.bf16.mxu0 0
        %1027 = vmatpush1.bf16.xpose.msra.mxu0 0
        %1028 = vmatprep.subr.bf16.mxu0 0
        %1029 = vmatpush1.bf16.xpose.msra.mxu0 %v1012
        %1030 = vmatprep.subr.bf16.mxu0 0
        %1031 = vmatpush2.bf16.xpose.msra.mxu0 0
        %1032 = vmatprep.subr.bf16.mxu0 0
        %1033 = vmatpush2.bf16.xpose.msra.mxu0 0
        %1034 = vmatprep.subr.bf16.mxu0 0
        %1035 = vmatpush2.bf16.xpose.msra.mxu0 0
        %1036 = vmatprep.subr.bf16.mxu0 0
        %1037 = vmatpush2.bf16.xpose.msra.mxu0 0
        %1038 = vmatprep.subr.bf16.mxu0 0
        %1039 = vmatpush2.bf16.xpose.msra.mxu0 0
        %1040 = vmatprep.subr.bf16.mxu0 0
        %1041 = vmatpush2.bf16.xpose.msra.mxu0 0
        %1042 = vmatprep.subr.bf16.mxu0 0
        %1043 = vmatpush2.bf16.xpose.msra.mxu0 0
        %1044 = vmatprep.subr.bf16.mxu0 0
        %1045 = vmatpush2.bf16.xpose.msra.mxu0 0
        %1046 = vmatprep.mubr.bf16.mxu0 0
        %1047 = vmatmul.mubr.bf16.gmra.mxu0 %v1009
        %v1048 = vpop.f32.mrf.mxu0
        %v1049 = vadd.f32 0.0, %v1048
        %v1050 = vpop.f32.mrf.mxu0
        %v1051 = vpop.f32.mrf.mxu0
        %v1052 = vpop.f32.mrf.mxu0
        %1053 = vdwg.mxu0
        %v1054 = vsel %vm517, %v999, -inf
        %1055 = vmax.xlane.f32.xlu0 %v1054
        %v1056 = vpop.xlane.xlu0 %1055
        %v1057 = vsel %vm517, %v1049, -inf
        %1058 = vmax.xlane.f32.xlu0 %v1057
        %v1059 = vpop.xlane.xlu0 %1058
        %v1060 = vsub.f32 %v999, %v1056
        %v1061 = vsub.f32 %v1049, %v1059
        %v1062 = vmul.f32 %v1060, 1.442695
        %v1063 = vpow.pop %v1062
        %v1064 = vmul.f32 %v1061, 1.442695
        %v1065 = vpow.pop %v1064
        %v1066 = vsel %vm517, %v1063, 0.0
        %1067 = vadd.xlane.f32.xlu0 %v1066
        %v1068 = vpop.xlane.xlu0 %1067
        %v1069 = vsel %vm517, %v1065, 0.0
        %1070 = vadd.xlane.f32.xlu0 %v1069
        %v1071 = vpop.xlane.xlu0 %1070
        %v1072 = vrcp.pop %v1068
        %v1073 = vrcp.pop %v1071
        %v1074 = vmul.f32 %v1063, %v1072
        %v1075 = vmul.f32 %v1065, %v1073
        %v1076 = vpack.c.bf16 %v1074, %v1074
        %v1077 = vpack.c.bf16 %v1075, %v1075
        %1078 = vrot.lane.b32.xlu0 %v512, 48
        %v1079 = vpop.permute.xlu0 %1078
        %v1081 = vsel %vm517, %v1076, 0
        %v1084 = vsel %vm642, %v1079, 0
        %1086 = vmatprep.subr.bf16.mxu0 0
        %1087 = vmatpush1.bf16.msra.mxu0 0
        %1088 = vmatprep.subr.bf16.mxu0 0
        %1089 = vmatpush1.bf16.msra.mxu0 0
        %1090 = vmatprep.subr.bf16.mxu0 0
        %1091 = vmatpush1.bf16.msra.mxu0 0
        %1092 = vmatprep.subr.bf16.mxu0 0
        %1093 = vmatpush1.bf16.msra.mxu0 0
        %1094 = vmatprep.subr.bf16.mxu0 0
        %1095 = vmatpush1.bf16.msra.mxu0 0
        %1096 = vmatprep.subr.bf16.mxu0 0
        %1097 = vmatpush1.bf16.msra.mxu0 0
        %1098 = vmatprep.subr.bf16.mxu0 0
        %1099 = vmatpush1.bf16.msra.mxu0 0
        %1100 = vmatprep.subr.bf16.mxu0 0
        %1101 = vmatpush1.bf16.msra.mxu0 %v1084
        %1102 = vmatprep.subr.bf16.mxu0 0
        %1103 = vmatpush2.bf16.msra.mxu0 0
        %1104 = vmatprep.subr.bf16.mxu0 0
        %1105 = vmatpush2.bf16.msra.mxu0 0
        %1106 = vmatprep.subr.bf16.mxu0 0
        %1107 = vmatpush2.bf16.msra.mxu0 0
        %1108 = vmatprep.subr.bf16.mxu0 0
        %1109 = vmatpush2.bf16.msra.mxu0 0
        %1110 = vmatprep.subr.bf16.mxu0 0
        %1111 = vmatpush2.bf16.msra.mxu0 0
        %1112 = vmatprep.subr.bf16.mxu0 0
        %1113 = vmatpush2.bf16.msra.mxu0 0
        %1114 = vmatprep.subr.bf16.mxu0 0
        %1115 = vmatpush2.bf16.msra.mxu0 0
        %1116 = vmatprep.subr.bf16.mxu0 0
        %1117 = vmatpush2.bf16.msra.mxu0 0
        %1118 = vmatprep.mubr.bf16.mxu0 0
        %1119 = vmatmul.mubr.bf16.gmra.mxu0 %v1081
        %v1120 = vpop.f32.mrf.mxu0
        %v1121 = vadd.f32 0.0, %v1120
        %v1122 = vpop.f32.mrf.mxu0
        %v1123 = vpop.f32.mrf.mxu0
        %v1124 = vpop.f32.mrf.mxu0
        %1125 = vdwg.mxu0
        %1126 = vrot.lane.b32.xlu0 %v513, 48
        %v1127 = vpop.permute.xlu0 %1126
        %v1129 = vsel %vm517, %v1077, 0
        %v1132 = vsel %vm642, %v1127, 0
        %1134 = vmatprep.subr.bf16.mxu0 0
        %1135 = vmatpush1.bf16.msra.mxu0 0
        %1136 = vmatprep.subr.bf16.mxu0 0
        %1137 = vmatpush1.bf16.msra.mxu0 0
        %1138 = vmatprep.subr.bf16.mxu0 0
        %1139 = vmatpush1.bf16.msra.mxu0 0
        %1140 = vmatprep.subr.bf16.mxu0 0
        %1141 = vmatpush1.bf16.msra.mxu0 0
        %1142 = vmatprep.subr.bf16.mxu0 0
        %1143 = vmatpush1.bf16.msra.mxu0 0
        %1144 = vmatprep.subr.bf16.mxu0 0
        %1145 = vmatpush1.bf16.msra.mxu0 0
        %1146 = vmatprep.subr.bf16.mxu0 0
        %1147 = vmatpush1.bf16.msra.mxu0 0
        %1148 = vmatprep.subr.bf16.mxu0 0
        %1149 = vmatpush1.bf16.msra.mxu0 %v1132
        %1150 = vmatprep.subr.bf16.mxu0 0
        %1151 = vmatpush2.bf16.msra.mxu0 0
        %1152 = vmatprep.subr.bf16.mxu0 0
        %1153 = vmatpush2.bf16.msra.mxu0 0
        %1154 = vmatprep.subr.bf16.mxu0 0
        %1155 = vmatpush2.bf16.msra.mxu0 0
        %1156 = vmatprep.subr.bf16.mxu0 0
        %1157 = vmatpush2.bf16.msra.mxu0 0
        %1158 = vmatprep.subr.bf16.mxu0 0
        %1159 = vmatpush2.bf16.msra.mxu0 0
        %1160 = vmatprep.subr.bf16.mxu0 0
        %1161 = vmatpush2.bf16.msra.mxu0 0
        %1162 = vmatprep.subr.bf16.mxu0 0
        %1163 = vmatpush2.bf16.msra.mxu0 0
        %1164 = vmatprep.subr.bf16.mxu0 0
        %1165 = vmatpush2.bf16.msra.mxu0 0
        %1166 = vmatprep.mubr.bf16.mxu0 0
        %1167 = vmatmul.mubr.bf16.gmra.mxu0 %v1129
        %v1168 = vpop.f32.mrf.mxu0
        %v1169 = vadd.f32 0.0, %v1168
        %v1170 = vpop.f32.mrf.mxu0
        %v1171 = vpop.f32.mrf.mxu0
        %v1172 = vpop.f32.mrf.mxu0
        %1173 = vdwg.mxu0
        %1174 = vrot.lane.b32.xlu0 %v512, 104
        %v1175 = vpop.permute.xlu0 %1174
        %1176 = vrot.lane.b32.xlu0 %v512, 72
        %v1177 = vpop.permute.xlu0 %1176
        %v1179 = vsel %vm517, %v1175, 0
        %v1182 = vsel %vm517, %v1177, 0
        %1184 = vmatprep.subr.bf16.mxu0 0
        %1185 = vmatpush1.bf16.xpose.msra.mxu0 0
        %1186 = vmatprep.subr.bf16.mxu0 0
        %1187 = vmatpush1.bf16.xpose.msra.mxu0 0
        %1188 = vmatprep.subr.bf16.mxu0 0
        %1189 = vmatpush1.bf16.xpose.msra.mxu0 0
        %1190 = vmatprep.subr.bf16.mxu0 0
        %1191 = vmatpush1.bf16.xpose.msra.mxu0 0
        %1192 = vmatprep.subr.bf16.mxu0 0
        %1193 = vmatpush1.bf16.xpose.msra.mxu0 0
        %1194 = vmatprep.subr.bf16.mxu0 0
        %1195 = vmatpush1.bf16.xpose.msra.mxu0 0
        %1196 = vmatprep.subr.bf16.mxu0 0
        %1197 = vmatpush1.bf16.xpose.msra.mxu0 0
        %1198 = vmatprep.subr.bf16.mxu0 0
        %1199 = vmatpush1.bf16.xpose.msra.mxu0 %v1182
        %1200 = vmatprep.subr.bf16.mxu0 0
        %1201 = vmatpush2.bf16.xpose.msra.mxu0 0
        %1202 = vmatprep.subr.bf16.mxu0 0
        %1203 = vmatpush2.bf16.xpose.msra.mxu0 0
        %1204 = vmatprep.subr.bf16.mxu0 0
        %1205 = vmatpush2.bf16.xpose.msra.mxu0 0
        %1206 = vmatprep.subr.bf16.mxu0 0
        %1207 = vmatpush2.bf16.xpose.msra.mxu0 0
        %1208 = vmatprep.subr.bf16.mxu0 0
        %1209 = vmatpush2.bf16.xpose.msra.mxu0 0
        %1210 = vmatprep.subr.bf16.mxu0 0
        %1211 = vmatpush2.bf16.xpose.msra.mxu0 0
        %1212 = vmatprep.subr.bf16.mxu0 0
        %1213 = vmatpush2.bf16.xpose.msra.mxu0 0
        %1214 = vmatprep.subr.bf16.mxu0 0
        %1215 = vmatpush2.bf16.xpose.msra.mxu0 0
        %1216 = vmatprep.mubr.bf16.mxu0 0
        %1217 = vmatmul.mubr.bf16.gmra.mxu0 %v1179
        %v1218 = vpop.f32.mrf.mxu0
        %v1219 = vadd.f32 0.0, %v1218
        %v1220 = vpop.f32.mrf.mxu0
        %v1221 = vpop.f32.mrf.mxu0
        %v1222 = vpop.f32.mrf.mxu0
        %1223 = vdwg.mxu0
        %1224 = vrot.lane.b32.xlu0 %v513, 104
        %v1225 = vpop.permute.xlu0 %1224
        %1226 = vrot.lane.b32.xlu0 %v513, 72
        %v1227 = vpop.permute.xlu0 %1226
        %v1229 = vsel %vm517, %v1225, 0
        %v1232 = vsel %vm517, %v1227, 0
        %1234 = vmatprep.subr.bf16.mxu0 0
        %1235 = vmatpush1.bf16.xpose.msra.mxu0 0
        %1236 = vmatprep.subr.bf16.mxu0 0
        %1237 = vmatpush1.bf16.xpose.msra.mxu0 0
        %1238 = vmatprep.subr.bf16.mxu0 0
        %1239 = vmatpush1.bf16.xpose.msra.mxu0 0
        %1240 = vmatprep.subr.bf16.mxu0 0
        %1241 = vmatpush1.bf16.xpose.msra.mxu0 0
        %1242 = vmatprep.subr.bf16.mxu0 0
        %1243 = vmatpush1.bf16.xpose.msra.mxu0 0
        %1244 = vmatprep.subr.bf16.mxu0 0
        %1245 = vmatpush1.bf16.xpose.msra.mxu0 0
        %1246 = vmatprep.subr.bf16.mxu0 0
        %1247 = vmatpush1.bf16.xpose.msra.mxu0 0
        %1248 = vmatprep.subr.bf16.mxu0 0
        %1249 = vmatpush1.bf16.xpose.msra.mxu0 %v1232
        %1250 = vmatprep.subr.bf16.mxu0 0
        %1251 = vmatpush2.bf16.xpose.msra.mxu0 0
        %1252 = vmatprep.subr.bf16.mxu0 0
        %1253 = vmatpush2.bf16.xpose.msra.mxu0 0
        %1254 = vmatprep.subr.bf16.mxu0 0
        %1255 = vmatpush2.bf16.xpose.msra.mxu0 0
        %1256 = vmatprep.subr.bf16.mxu0 0
        %1257 = vmatpush2.bf16.xpose.msra.mxu0 0
        %1258 = vmatprep.subr.bf16.mxu0 0
        %1259 = vmatpush2.bf16.xpose.msra.mxu0 0
        %1260 = vmatprep.subr.bf16.mxu0 0
        %1261 = vmatpush2.bf16.xpose.msra.mxu0 0
        %1262 = vmatprep.subr.bf16.mxu0 0
        %1263 = vmatpush2.bf16.xpose.msra.mxu0 0
        %1264 = vmatprep.subr.bf16.mxu0 0
        %1265 = vmatpush2.bf16.xpose.msra.mxu0 0
        %1266 = vmatprep.mubr.bf16.mxu0 0
        %1267 = vmatmul.mubr.bf16.gmra.mxu0 %v1229
        %v1268 = vpop.f32.mrf.mxu0
        %v1269 = vadd.f32 0.0, %v1268
        %v1270 = vpop.f32.mrf.mxu0
        %v1271 = vpop.f32.mrf.mxu0
        %v1272 = vpop.f32.mrf.mxu0
        %1273 = vdwg.mxu0
        %v1274 = vsel %vm517, %v1219, -inf
        %1275 = vmax.xlane.f32.xlu0 %v1274
        %v1276 = vpop.xlane.xlu0 %1275
        %v1277 = vsel %vm517, %v1269, -inf
        %1278 = vmax.xlane.f32.xlu0 %v1277
        %v1279 = vpop.xlane.xlu0 %1278
        %v1280 = vsub.f32 %v1219, %v1276
        %v1281 = vsub.f32 %v1269, %v1279
        %v1282 = vmul.f32 %v1280, 1.442695
        %v1283 = vpow.pop %v1282
        %v1284 = vmul.f32 %v1281, 1.442695
        %v1285 = vpow.pop %v1284
        %v1286 = vsel %vm517, %v1283, 0.0
        %1287 = vadd.xlane.f32.xlu0 %v1286
        %v1288 = vpop.xlane.xlu0 %1287
        %v1289 = vsel %vm517, %v1285, 0.0
        %1290 = vadd.xlane.f32.xlu0 %v1289
        %v1291 = vpop.xlane.xlu0 %1290
        %v1292 = vrcp.pop %v1288
        %v1293 = vrcp.pop %v1291
        %v1294 = vmul.f32 %v1283, %v1292
        %v1295 = vmul.f32 %v1285, %v1293
        %v1296 = vpack.c.bf16 %v1294, %v1294
        %v1297 = vpack.c.bf16 %v1295, %v1295
        %1298 = vrot.lane.b32.xlu0 %v512, 40
        %v1299 = vpop.permute.xlu0 %1298
        %v1301 = vsel %vm517, %v1296, 0
        %v1304 = vsel %vm642, %v1299, 0
        %1306 = vmatprep.subr.bf16.mxu0 0
        %1307 = vmatpush1.bf16.msra.mxu0 0
        %1308 = vmatprep.subr.bf16.mxu0 0
        %1309 = vmatpush1.bf16.msra.mxu0 0
        %1310 = vmatprep.subr.bf16.mxu0 0
        %1311 = vmatpush1.bf16.msra.mxu0 0
        %1312 = vmatprep.subr.bf16.mxu0 0
        %1313 = vmatpush1.bf16.msra.mxu0 0
        %1314 = vmatprep.subr.bf16.mxu0 0
        %1315 = vmatpush1.bf16.msra.mxu0 0
        %1316 = vmatprep.subr.bf16.mxu0 0
        %1317 = vmatpush1.bf16.msra.mxu0 0
        %1318 = vmatprep.subr.bf16.mxu0 0
        %1319 = vmatpush1.bf16.msra.mxu0 0
        %1320 = vmatprep.subr.bf16.mxu0 0
        %1321 = vmatpush1.bf16.msra.mxu0 %v1304
        %1322 = vmatprep.subr.bf16.mxu0 0
        %1323 = vmatpush2.bf16.msra.mxu0 0
        %1324 = vmatprep.subr.bf16.mxu0 0
        %1325 = vmatpush2.bf16.msra.mxu0 0
        %1326 = vmatprep.subr.bf16.mxu0 0
        %1327 = vmatpush2.bf16.msra.mxu0 0
        %1328 = vmatprep.subr.bf16.mxu0 0
        %1329 = vmatpush2.bf16.msra.mxu0 0
        %1330 = vmatprep.subr.bf16.mxu0 0
        %1331 = vmatpush2.bf16.msra.mxu0 0
        %1332 = vmatprep.subr.bf16.mxu0 0
        %1333 = vmatpush2.bf16.msra.mxu0 0
        %1334 = vmatprep.subr.bf16.mxu0 0
        %1335 = vmatpush2.bf16.msra.mxu0 0
        %1336 = vmatprep.subr.bf16.mxu0 0
        %1337 = vmatpush2.bf16.msra.mxu0 0
        %1338 = vmatprep.mubr.bf16.mxu0 0
        %1339 = vmatmul.mubr.bf16.gmra.mxu0 %v1301
        %v1340 = vpop.f32.mrf.mxu0
        %v1341 = vadd.f32 0.0, %v1340
        %v1342 = vpop.f32.mrf.mxu0
        %v1343 = vpop.f32.mrf.mxu0
        %v1344 = vpop.f32.mrf.mxu0
        %1345 = vdwg.mxu0
        %1346 = vrot.lane.b32.xlu0 %v513, 40
        %v1347 = vpop.permute.xlu0 %1346
        %v1349 = vsel %vm517, %v1297, 0
        %v1352 = vsel %vm642, %v1347, 0
        %1354 = vmatprep.subr.bf16.mxu0 0
        %1355 = vmatpush1.bf16.msra.mxu0 0
        %1356 = vmatprep.subr.bf16.mxu0 0
        %1357 = vmatpush1.bf16.msra.mxu0 0
        %1358 = vmatprep.subr.bf16.mxu0 0
        %1359 = vmatpush1.bf16.msra.mxu0 0
        %1360 = vmatprep.subr.bf16.mxu0 0
        %1361 = vmatpush1.bf16.msra.mxu0 0
        %1362 = vmatprep.subr.bf16.mxu0 0
        %1363 = vmatpush1.bf16.msra.mxu0 0
        %1364 = vmatprep.subr.bf16.mxu0 0
        %1365 = vmatpush1.bf16.msra.mxu0 0
        %1366 = vmatprep.subr.bf16.mxu0 0
        %1367 = vmatpush1.bf16.msra.mxu0 0
        %1368 = vmatprep.subr.bf16.mxu0 0
        %1369 = vmatpush1.bf16.msra.mxu0 %v1352
        %1370 = vmatprep.subr.bf16.mxu0 0
        %1371 = vmatpush2.bf16.msra.mxu0 0
        %1372 = vmatprep.subr.bf16.mxu0 0
        %1373 = vmatpush2.bf16.msra.mxu0 0
        %1374 = vmatprep.subr.bf16.mxu0 0
        %1375 = vmatpush2.bf16.msra.mxu0 0
        %1376 = vmatprep.subr.bf16.mxu0 0
        %1377 = vmatpush2.bf16.msra.mxu0 0
        %1378 = vmatprep.subr.bf16.mxu0 0
        %1379 = vmatpush2.bf16.msra.mxu0 0
        %1380 = vmatprep.subr.bf16.mxu0 0
        %1381 = vmatpush2.bf16.msra.mxu0 0
        %1382 = vmatprep.subr.bf16.mxu0 0
        %1383 = vmatpush2.bf16.msra.mxu0 0
        %1384 = vmatprep.subr.bf16.mxu0 0
        %1385 = vmatpush2.bf16.msra.mxu0 0
        %1386 = vmatprep.mubr.bf16.mxu0 0
        %1387 = vmatmul.mubr.bf16.gmra.mxu0 %v1349
        %v1388 = vpop.f32.mrf.mxu0
        %v1389 = vadd.f32 0.0, %v1388
        %v1390 = vpop.f32.mrf.mxu0
        %v1391 = vpop.f32.mrf.mxu0
        %v1392 = vpop.f32.mrf.mxu0
        %1393 = vdwg.mxu0
        %1396 = vrot.lane.b32.xlu0 %v901, 8
        %v1397 = vpop.permute.xlu0 %1396
        %1398 = vrot.lane.b32.xlu0 %v949, 8
        %v1399 = vpop.permute.xlu0 %1398
        %1404 = vrot.lane.b32.xlu0 %v1121, 16
        %v1405 = vpop.permute.xlu0 %1404
        %1406 = vrot.lane.b32.xlu0 %v1169, 16
        %v1407 = vpop.permute.xlu0 %1406
        %1412 = vrot.lane.b32.xlu0 %v1341, 24
        %v1413 = vpop.permute.xlu0 %1412
        %1414 = vrot.lane.b32.xlu0 %v1389, 24
        %v1415 = vpop.permute.xlu0 %1414
        %v1418 = vsel %vm517, %v681, %v1397
        %v1419 = vsel %vm517, %v729, %v1399
        %vm1420 = vcmask 130048
        %v1421 = vsel %vm1420, %v1418, %v1405
        %v1422 = vsel %vm1420, %v1419, %v1407
        %vm1423 = vcmask 195584
        %v1424 = vsel %vm1423, %v1421, %v1413
        %v1425 = vsel %vm1423, %v1422, %v1415
        %v1426 = vpack.c.bf16 %v1425, %v1424
        %v1427 = vld [vmem:[%s419] sm:$0xf]
        %v1428 = vld [vmem:[%s419 + $0x4] sm:$0xf]
        %v1429 = vld [vmem:[%s419 + $0x8] sm:$0xf]
        %v1430 = vld [vmem:[%s419 + $0xc] sm:$0xf]
        %v1431 = vlaneseq
        %v1432 = vshrl.u32 %v1431, 7
        %v1433 = vsub.s32 2, %v1432
        %v1434 = vrot.slane %v446, %v1433
        %v1439 = vunpack.c.l.b16 %v1427
        %v1440 = vunpack.c.l.b16 %v1428
        %v1441 = vunpack.c.l.b16 %v1429
        %v1442 = vunpack.c.l.b16 %v1430
        %v1443 = vpack.c.b16 %v1440, %v1439
        %v1444 = vpack.c.b16 %v1442, %v1441
        %v1448 = vsel %vm467, %v1426, 0
        %1450 = vmatprep.subr.bf16.mxu0 0
        %1451 = vmatpush1.bf16.msra.mxu0 0
        %1452 = vmatprep.subr.bf16.mxu0 0
        %1453 = vmatpush1.bf16.msra.mxu0 0
        %1454 = vmatprep.subr.bf16.mxu0 0
        %1455 = vmatpush1.bf16.msra.mxu0 0
        %1456 = vmatprep.subr.bf16.mxu0 0
        %1457 = vmatpush1.bf16.msra.mxu0 0
        %1458 = vmatprep.subr.bf16.mxu0 0
        %1459 = vmatpush1.bf16.msra.mxu0 0
        %1460 = vmatprep.subr.bf16.mxu0 0
        %1461 = vmatpush1.bf16.msra.mxu0 0
        %1462 = vmatprep.subr.bf16.mxu0 0
        %1463 = vmatpush1.bf16.msra.mxu0 %v1444
        %1464 = vmatprep.subr.bf16.mxu0 0
        %1465 = vmatpush1.bf16.msra.mxu0 %v1443
        %1466 = vmatprep.subr.bf16.mxu0 0
        %1467 = vmatpush2.bf16.msra.mxu0 0
        %1468 = vmatprep.subr.bf16.mxu0 0
        %1469 = vmatpush2.bf16.msra.mxu0 0
        %1470 = vmatprep.subr.bf16.mxu0 0
        %1471 = vmatpush2.bf16.msra.mxu0 0
        %1472 = vmatprep.subr.bf16.mxu0 0
        %1473 = vmatpush2.bf16.msra.mxu0 0
        %1474 = vmatprep.subr.bf16.mxu0 0
        %1475 = vmatpush2.bf16.msra.mxu0 0
        %1476 = vmatprep.subr.bf16.mxu0 0
        %1477 = vmatpush2.bf16.msra.mxu0 0
        %1478 = vmatprep.subr.bf16.mxu0 0
        %1479 = vmatpush2.bf16.msra.mxu0 0
        %1480 = vmatprep.subr.bf16.mxu0 0
        %1481 = vmatpush2.bf16.msra.mxu0 0
        %1482 = vmatprep.mubr.bf16.mxu0 0
        %1483 = vmatmul.mubr.bf16.gmra.mxu0 %v1448
        %v1484 = vpop.f32.mrf.mxu0
        %v1485 = vadd.f32 %v1434, %v1484
        %v1486 = vpop.f32.mrf.mxu0
        %v1487 = vpop.f32.mrf.mxu0
        %v1488 = vadd.f32 %v1434, %v1487
        %v1489 = vpop.f32.mrf.mxu0
        %1490 = vdwg.mxu0
        %v1491 = vadd.f32 %v443, %v1485
        %v1492 = vadd.f32 %v444, %v1488
        %v1493 = vsel %vm467, %v1491, 0.0
        %1494 = vadd.xlane.f32.xlu0 %v1493
        %v1495 = vpop.xlane.xlu0 %1494
        %v1496 = vsel %vm467, %v1492, 0.0
        %1497 = vadd.xlane.f32.xlu0 %v1496
        %v1498 = vpop.xlane.xlu0 %1497
        %v1499 = vrcp.pop 32.0
        %v1500 = vmul.f32 %v1495, %v1499
        %v1501 = vmul.f32 %v1498, %v1499
        %v1502 = vsub.f32 %v1491, %v1500
        %v1503 = vsub.f32 %v1492, %v1501
        %v1504 = vmul.f32 %v1502, %v1502
        %v1505 = vmul.f32 %v1503, %v1503
        %v1506 = vsel %vm467, %v1504, 0.0
        %1507 = vadd.xlane.f32.xlu0 %v1506
        %v1508 = vpop.xlane.xlu0 %1507
        %v1509 = vsel %vm467, %v1505, 0.0
        %1510 = vadd.xlane.f32.xlu0 %v1509
        %v1511 = vpop.xlane.xlu0 %1510
        %v1512 = vmul.f32 %v1508, %v1499
        %v1513 = vmul.f32 %v1511, %v1499
        %v1514 = vadd.f32 %v1512, 1e-05
        %v1515 = vadd.f32 %v1513, 1e-05
        %v1516 = vrsqrt.pop %v1514
        %v1517 = vrsqrt.pop %v1515
        %v1518 = vmul.f32 %v1502, %v1516
        %v1519 = vmul.f32 %v1503, %v1517
        %v1520 = vlaneseq
        %v1521 = vshrl.u32 %v1520, 7
        %v1522 = vsub.s32 3, %v1521
        %v1523 = vrot.slane %v446, %v1522
        %v1524 = vmul.f32 %v1518, %v1523
        %v1525 = vmul.f32 %v1519, %v1523
        %v1526 = vlaneseq
        %v1527 = vshrl.u32 %v1526, 7
        %v1528 = vsub.s32 4, %v1527
        %v1529 = vrot.slane %v446, %v1528
        %v1530 = vadd.f32 %v1524, %v1529
        %v1531 = vadd.f32 %v1525, %v1529
        %v1532 = vpack.c.bf16 %v1531, %v1530
        %v1533 = vld [vmem:[%s424] sm:$0xf]
        %v1534 = vld [vmem:[%s424 + $0x4] sm:$0xf]
        %v1535 = vld [vmem:[%s424 + $0x8] sm:$0xf]
        %v1536 = vld [vmem:[%s424 + $0xc] sm:$0xf]
        %v1537 = vlaneseq
        %v1538 = vshrl.u32 %v1537, 7
        %v1539 = vsub.s32 1, %v1538
        %v1540 = vrot.slane %v446, %v1539
        %v1545 = vunpack.c.l.b16 %v1533
        %v1546 = vunpack.c.l.b16 %v1534
        %v1547 = vunpack.c.l.b16 %v1535
        %v1548 = vunpack.c.l.b16 %v1536
        %v1549 = vpack.c.b16 %v1546, %v1545
        %v1550 = vpack.c.b16 %v1548, %v1547
        %v1554 = vsel %vm467, %v1532, 0
        %1556 = vmatprep.subr.bf16.mxu0 0
        %1557 = vmatpush1.bf16.msra.mxu0 0
        %1558 = vmatprep.subr.bf16.mxu0 0
        %1559 = vmatpush1.bf16.msra.mxu0 0
        %1560 = vmatprep.subr.bf16.mxu0 0
        %1561 = vmatpush1.bf16.msra.mxu0 0
        %1562 = vmatprep.subr.bf16.mxu0 0
        %1563 = vmatpush1.bf16.msra.mxu0 0
        %1564 = vmatprep.subr.bf16.mxu0 0
        %1565 = vmatpush1.bf16.msra.mxu0 0
        %1566 = vmatprep.subr.bf16.mxu0 0
        %1567 = vmatpush1.bf16.msra.mxu0 0
        %1568 = vmatprep.subr.bf16.mxu0 0
        %1569 = vmatpush1.bf16.msra.mxu0 %v1550
        %1570 = vmatprep.subr.bf16.mxu0 0
        %1571 = vmatpush1.bf16.msra.mxu0 %v1549
        %1572 = vmatprep.subr.bf16.mxu0 0
        %1573 = vmatpush2.bf16.msra.mxu0 0
        %1574 = vmatprep.subr.bf16.mxu0 0
        %1575 = vmatpush2.bf16.msra.mxu0 0
        %1576 = vmatprep.subr.bf16.mxu0 0
        %1577 = vmatpush2.bf16.msra.mxu0 0
        %1578 = vmatprep.subr.bf16.mxu0 0
        %1579 = vmatpush2.bf16.msra.mxu0 0
        %1580 = vmatprep.subr.bf16.mxu0 0
        %1581 = vmatpush2.bf16.msra.mxu0 0
        %1582 = vmatprep.subr.bf16.mxu0 0
        %1583 = vmatpush2.bf16.msra.mxu0 0
        %1584 = vmatprep.subr.bf16.mxu0 0
        %1585 = vmatpush2.bf16.msra.mxu0 0
        %1586 = vmatprep.subr.bf16.mxu0 0
        %1587 = vmatpush2.bf16.msra.mxu0 0
        %1588 = vmatprep.mubr.bf16.mxu0 0
        %1589 = vmatmul.mubr.bf16.gmra.mxu0 %v1554
        %v1590 = vpop.f32.mrf.mxu0
        %v1591 = vadd.f32 %v1540, %v1590
        %v1592 = vpop.f32.mrf.mxu0
        %v1593 = vpop.f32.mrf.mxu0
        %v1594 = vadd.f32 %v1540, %v1593
        %v1595 = vpop.f32.mrf.mxu0
        %1596 = vdwg.mxu0
        %v1597 = vmax.f32 %v1591, 0.0
        %v1598 = vmax.f32 %v1594, 0.0
        %v1599 = vpack.c.bf16 %v1598, %v1597
        %v1600 = vld [vmem:[%s429] sm:$0xf]
        %v1601 = vld [vmem:[%s429 + $0x4] sm:$0xf]
        %v1602 = vld [vmem:[%s429 + $0x8] sm:$0xf]
        %v1603 = vld [vmem:[%s429 + $0xc] sm:$0xf]
        %v1604 = vld [vmem:[%s429 + $0x10] sm:$0xf]
        %v1605 = vld [vmem:[%s429 + $0x14] sm:$0xf]
        %v1606 = vld [vmem:[%s429 + $0x18] sm:$0xf]
        %v1607 = vld [vmem:[%s429 + $0x1c] sm:$0xf]
        %v1608 = vlaneseq
        %v1609 = vshrl.u32 %v1608, 7
        %v1610 = vsub.s32 7, %v1609
        %v1611 = vrot.slane %v446, %v1610
        %v1620 = vunpack.c.l.b16 %v1600
        %v1621 = vunpack.c.l.b16 %v1601
        %v1622 = vunpack.c.l.b16 %v1602
        %v1623 = vunpack.c.l.b16 %v1603
        %v1624 = vunpack.c.l.b16 %v1604
        %v1625 = vunpack.c.l.b16 %v1605
        %v1626 = vunpack.c.l.b16 %v1606
        %v1627 = vunpack.c.l.b16 %v1607
        %v1628 = vpack.c.b16 %v1621, %v1620
        %v1629 = vpack.c.b16 %v1623, %v1622
        %v1630 = vpack.c.b16 %v1625, %v1624
        %v1631 = vpack.c.b16 %v1627, %v1626
        %vm1636 = vcmask 523264
        %v1638 = vsel %vm1636, %v1599, 0
        %1640 = vmatprep.subr.bf16.mxu0 0
        %1641 = vmatpush1.bf16.msra.mxu0 0
        %1642 = vmatprep.subr.bf16.mxu0 0
        %1643 = vmatpush1.bf16.msra.mxu0 0
        %1644 = vmatprep.subr.bf16.mxu0 0
        %1645 = vmatpush1.bf16.msra.mxu0 0
        %1646 = vmatprep.subr.bf16.mxu0 0
        %1647 = vmatpush1.bf16.msra.mxu0 0
        %1648 = vmatprep.subr.bf16.mxu0 0
        %1649 = vmatpush1.bf16.msra.mxu0 %v1631
        %1650 = vmatprep.subr.bf16.mxu0 0
        %1651 = vmatpush1.bf16.msra.mxu0 %v1630
        %1652 = vmatprep.subr.bf16.mxu0 0
        %1653 = vmatpush1.bf16.msra.mxu0 %v1629
        %1654 = vmatprep.subr.bf16.mxu0 0
        %1655 = vmatpush1.bf16.msra.mxu0 %v1628
        %1656 = vmatprep.subr.bf16.mxu0 0
        %1657 = vmatpush2.bf16.msra.mxu0 0
        %1658 = vmatprep.subr.bf16.mxu0 0
        %1659 = vmatpush2.bf16.msra.mxu0 0
        %1660 = vmatprep.subr.bf16.mxu0 0
        %1661 = vmatpush2.bf16.msra.mxu0 0
        %1662 = vmatprep.subr.bf16.mxu0 0
        %1663 = vmatpush2.bf16.msra.mxu0 0
        %1664 = vmatprep.subr.bf16.mxu0 0
        %1665 = vmatpush2.bf16.msra.mxu0 0
        %1666 = vmatprep.subr.bf16.mxu0 0
        %1667 = vmatpush2.bf16.msra.mxu0 0
        %1668 = vmatprep.subr.bf16.mxu0 0
        %1669 = vmatpush2.bf16.msra.mxu0 0
        %1670 = vmatprep.subr.bf16.mxu0 0
        %1671 = vmatpush2.bf16.msra.mxu0 0
        %1672 = vmatprep.mubr.bf16.mxu0 0
        %1673 = vmatmul.mubr.bf16.gmra.mxu0 %v1638
        %v1674 = vpop.f32.mrf.mxu0
        %v1675 = vadd.f32 %v1611, %v1674
        %v1676 = vpop.f32.mrf.mxu0
        %v1677 = vpop.f32.mrf.mxu0
        %v1678 = vadd.f32 %v1611, %v1677
        %v1679 = vpop.f32.mrf.mxu0
        %1680 = vdwg.mxu0
        %v1681 = vadd.f32 %v1530, %v1675
        %v1682 = vadd.f32 %v1531, %v1678
        %v1683 = vsel %vm467, %v1681, 0.0
        %1684 = vadd.xlane.f32.xlu0 %v1683
        %v1685 = vpop.xlane.xlu0 %1684
        %v1686 = vsel %vm467, %v1682, 0.0
        %1687 = vadd.xlane.f32.xlu0 %v1686
        %v1688 = vpop.xlane.xlu0 %1687
        %v1689 = vmul.f32 %v1685, %v1499
        %v1690 = vmul.f32 %v1688, %v1499
        %v1691 = vsub.f32 %v1681, %v1689
        %v1692 = vsub.f32 %v1682, %v1690
        %v1693 = vmul.f32 %v1691, %v1691
        %v1694 = vmul.f32 %v1692, %v1692
        %v1695 = vsel %vm467, %v1693, 0.0
        %1696 = vadd.xlane.f32.xlu0 %v1695
        %v1697 = vpop.xlane.xlu0 %1696
        %v1698 = vsel %vm467, %v1694, 0.0
        %1699 = vadd.xlane.f32.xlu0 %v1698
        %v1700 = vpop.xlane.xlu0 %1699
        %v1701 = vmul.f32 %v1697, %v1499
        %v1702 = vmul.f32 %v1700, %v1499
        %v1703 = vadd.f32 %v1701, 1e-05
        %v1704 = vadd.f32 %v1702, 1e-05
        %v1705 = vrsqrt.pop %v1703
        %v1706 = vrsqrt.pop %v1704
        %v1707 = vmul.f32 %v1691, %v1705
        %v1708 = vmul.f32 %v1692, %v1706
        %v1709 = vlaneseq
        %v1710 = vshrl.u32 %v1709, 7
        %v1711 = vsub.s32 5, %v1710
        %v1712 = vrot.slane %v446, %v1711
        %v1713 = vmul.f32 %v1707, %v1712
        %v1714 = vmul.f32 %v1708, %v1712
        %v1715 = vlaneseq
        %v1716 = vshrl.u32 %v1715, 7
        %v1717 = vsub.s32 6, %v1716
        %v1718 = vrot.slane %v446, %v1717
        %v1719 = vadd.f32 %v1713, %v1718
        %v1720 = vadd.f32 %v1714, %v1718
        %1721 = vst.msk [vmem:[#allocation2] sm:$0xff] %vm467, %v1719
        %1722 = vst.msk [vmem:[#allocation2 + $0x8] sm:$0xff] %vm467, %v1720
        %p1723 = scmp.eq.s32.totalorder %s29, 1
        // Predicated region
        $region65: #{tpu_custom_call.1} parent=51 // pred_check
          %p1724 = pneg %p1723
        $region66: #{tpu_custom_call.1} parent=51 // pred_check_branch
          %1726 = sbr.rel (%p1724) target = $region68
        $region67: #{tpu_custom_call.1} parent=51 // pred_region
          %v1727 = vld [vmem:[%s6] sm:$0x1]
          %v1728 = vld [vmem:[%s7] sm:$0x1]
          %v1729 = vsel %vm467, %v1719, 0.0
          %1730 = vadd.xlane.f32.xlu0 %v1729
          %v1731 = vpop.xlane.xlu0 %1730
          %v1732 = vsel %vm467, %v1720, 0.0
          %1733 = vadd.xlane.f32.xlu0 %v1732
          %v1734 = vpop.xlane.xlu0 %1733
          %v1735 = vmul.f32 %v1731, %v1499
          %v1736 = vmul.f32 %v1734, %v1499
          %v1737 = vsub.f32 %v1719, %v1735
          %v1738 = vsub.f32 %v1720, %v1736
          %v1739 = vmul.f32 %v1737, %v1737
          %v1740 = vmul.f32 %v1738, %v1738
          %v1741 = vsel %vm467, %v1739, 0.0
          %1742 = vadd.xlane.f32.xlu0 %v1741
          %v1743 = vpop.xlane.xlu0 %1742
          %v1744 = vsel %vm467, %v1740, 0.0
          %1745 = vadd.xlane.f32.xlu0 %v1744
          %v1746 = vpop.xlane.xlu0 %1745
          %v1747 = vmul.f32 %v1743, %v1499
          %v1748 = vmul.f32 %v1746, %v1499
          %v1749 = vadd.f32 %v1747, 1e-05
          %v1750 = vadd.f32 %v1748, 1e-05
          %v1751 = vrsqrt.pop %v1749
          %v1752 = vrsqrt.pop %v1750
          %v1753 = vmul.f32 %v1737, %v1751
          %v1754 = vmul.f32 %v1738, %v1752
          %v1756 = vlaneseq
          %v1757 = vshrl.u32 %v1756, 7
          %v1758 = vsub.s32 0, %v1757
          %v1759 = vrot.slane %v1727, %v1758
          %v1761 = vmul.f32 %v1753, %v1759
          %v1762 = vmul.f32 %v1754, %v1759
          %v1764 = vlaneseq
          %v1765 = vshrl.u32 %v1764, 7
          %v1766 = vsub.s32 0, %v1765
          %v1767 = vrot.slane %v1728, %v1766
          %v1769 = vadd.f32 %v1761, %v1767
          %v1770 = vadd.f32 %v1762, %v1767
          %1771 = vst.msk [vmem:[#allocation8] sm:$0xff] %vm467, %v1769
          %1772 = vst.msk [vmem:[#allocation8 + $0x8] sm:$0xff] %vm467, %v1770
        $region68: #{tpu_custom_call.1} parent=51 // pred_fallthru
          _
        // Predicated region
        $region69: #{tpu_custom_call.1} parent=51 // pred_check
          %p1773 = pneg %p252
        $region70: #{tpu_custom_call.1} parent=51 // pred_check_branch
          %1775 = sbr.rel (%p1773) target = $region72
        $region71: #{tpu_custom_call.1} parent=51 // pred_region
          %s1776 = smul.u32 2, %s28
          %s1778 = ssub.s32 256, 256
          %1779 = vsyncadd [#allocation5], %s1778
          %s1780 = smul.addr %s1776, 128
          %s1781 = scalar_lea.hbm %s8, %s1780
          %s1782 = sshll.u32 [#allocation8], 4
          %s1783 = int_to_ptr.vmem [resolvable:$true] %s1782
          %1788 = dma.vmem_to_hbm [thread:$0]  %s1783, 256, %s1781, [#allocation5], 128, 128, 8
        $region72: #{tpu_custom_call.1} parent=51 // pred_fallthru
          _
        // Predicated region
        $region73: #{tpu_custom_call.1} parent=51 // pred_check
          %p1789 = pneg %p252
        $region74: #{tpu_custom_call.1} parent=51 // pred_check_branch
          %1791 = sbr.rel (%p1789) target = $region76
        $region75: #{tpu_custom_call.1} parent=51 // pred_region
          %1792 = dma.done [#allocation5], 256
        $region76: #{tpu_custom_call.1} parent=51 // pred_fallthru
          _
      $region52: #{tpu_custom_call.1} parent=5 // pred_fallthru
        _
      %p1793 = scmp.le.s32.totalorder 2, %s19
      // Predicated region
      $region77: #{tpu_custom_call.1} parent=5 // pred_check
        %p1794 = pneg %p1793
      $region78: #{tpu_custom_call.1} parent=5 // pred_check_branch
        %1796 = sbr.rel (%p1794) target = $region80
      $region79: #{tpu_custom_call.1} parent=5 // pred_region
        %s1797 = ssub.s32 %s19, 2
      $region80: #{tpu_custom_call.1} parent=5 // pred_fallthru
        _
    $region6: #{tpu_custom_call.1} parent=1 // loop_footer
      %s23 = sadd.s32 1, %s19
    $region7: #{tpu_custom_call.1} parent=1 // loop_footer_branch
      %18 = sbr.rel target = $region3
    $region8: #{tpu_custom_call.1} parent=1 // loop_exit
      _
    %1798 = vsyncpa [#allocation4], 1
    %s1799 = scalar_lea.sflag [#allocation4], 1
    %1800 = vsyncpa %s1799, 1
    %1801 = vsyncpa [#allocation7], 1
    %s1802 = scalar_lea.sflag [#allocation7], 1
    %1803 = vsyncpa %s1802, 1
    %1804 = vsyncpa [#allocation5], 1
    %s1805 = scalar_lea.sflag [#allocation5], 1
    %1806 = vsyncpa %s1805, 1

</llo_original>
